<compile_context>
chip_gen: v7x
topology: tpu7x:2x2x1
jax: 0.10.0
libtpu: 0.0.40
codegen_flags: <defaults>
</compile_context>

<pallas_src>
import math
from functools import partial

import jax
import jax.numpy as jnp
from jax import lax
from jax.experimental import pallas as pl
from jax.experimental.pallas import tpu as pltpu

_MASK_VALUE = -1e30            # finite mask: diagonal tiles never mask a full row
_VMEM_LIMIT_CACHE = None


def _vmem_limit() -> int:
    """3/4 of physical VMEM (capped at 96 MiB); 48 MiB fallback (v7x-safe)."""
    global _VMEM_LIMIT_CACHE
    if _VMEM_LIMIT_CACHE is None:
        limit = 48 * 1024 * 1024
        try:
            cap = int(pltpu.get_tpu_info().vmem_capacity_bytes)
            limit = min(96 * 1024 * 1024, (cap * 3) // 4)
        except Exception:
            pass
        _VMEM_LIMIT_CACHE = limit
    return _VMEM_LIMIT_CACHE


def _row_tile(n: int, target: int) -> int:
    """Largest tile <= target dividing n and a multiple of 8 (else full n)."""
    if n <= target:
        return n
    for t in range(target, 7, -1):
        if n % t == 0 and t % 8 == 0:
            return t
    return n


def _col_tile(c_out: int, c_in: int, itemsize: int,
              target: int = 1024, budget: int = 16 * 1024 * 1024) -> int:
    """Output-column tile for the linear stage: full width if the double-buffered
    weight block fits the budget, else the largest 128-multiple divisor."""
    if 2 * c_in * c_out * itemsize <= budget:
        return c_out
    start = (min(target, c_out) // 128) * 128
    for t in range(start, 0, -128):
        if c_out % t == 0:
            return t
    return c_out


# ---------------------------------------------------------------------------
# Stage 1 / 3: bias-fused linear kernel   out = x @ W_t + b   (rows x cols grid)
# ---------------------------------------------------------------------------
def _linear_kernel(x_ref, w_ref, b_ref, o_ref):
    acc = jnp.dot(x_ref[...], w_ref[...], preferred_element_type=jnp.float32)
    o_ref[...] = (acc + b_ref[...].astype(jnp.float32)).astype(o_ref.dtype)


def _linear(x2d, w_t, b2d, *, tile_r, tile_n):
    R, c_in = x2d.shape
    c_out = w_t.shape[1]
    isz = x2d.dtype.itemsize
    cost = pl.CostEstimate(
        flops=2 * R * c_in * c_out,
        transcendentals=0,
        bytes_accessed=isz * (R * c_in + R * c_out)
        + w_t.dtype.itemsize * c_in * c_out * max(1, R // tile_r)
        + 4 * c_out,
    )
    return pl.pallas_call(
        _linear_kernel,
        out_shape=jax.ShapeDtypeStruct((R, c_out), x2d.dtype),
        grid_spec=pltpu.PrefetchScalarGridSpec(
            num_scalar_prefetch=0,
            grid=(R // tile_r, c_out // tile_n),
            in_specs=[
                pl.BlockSpec((tile_r, c_in), lambda r, n: (r, 0)),   # x row tile
                pl.BlockSpec((c_in, tile_n), lambda r, n: (0, n)),   # W_t col tile
                pl.BlockSpec((1, tile_n), lambda r, n: (0, n)),      # bias cols
            ],
            out_specs=pl.BlockSpec((tile_r, tile_n), lambda r, n: (r, n)),
        ),
        compiler_params=pltpu.CompilerParams(
            dimension_semantics=("parallel", "parallel"),
            vmem_limit_bytes=_vmem_limit(),
        ),
        cost_estimate=cost,
    )(x2d, w_t, b2d)


# ---------------------------------------------------------------------------
# Stage 2: flash-style causal attention straight off the (B, T, 3C) qkv layout
# ---------------------------------------------------------------------------
def _flash_kernel(q_ref, k_ref, v_ref, o_ref, q_scr, m_scr, l_scr, acc_scr, *,
                  nh, hd):
    i = pl.program_id(1)   # q-tile index  ("parallel")
    j = pl.program_id(2)   # kv-tile index (reduction axis, innermost, "arbitrary")

    def split_heads(x):    # (ts, nh*hd) -> (nh, ts, hd): VMEM layout plumbing
        return jnp.stack([x[:, h * hd:(h + 1) * hd] for h in range(nh)], axis=0)

    @pl.when(j == 0)
    def _init():
        q_scr[...] = split_heads(q_ref[0])    # q pre-scaled by 1/sqrt(hd) via weights
        m_scr[...] = jnp.full(m_scr.shape, -jnp.inf, jnp.float32)
        l_scr[...] = jnp.zeros(l_scr.shape, jnp.float32)
        acc_scr[...] = jnp.zeros(acc_scr.shape, jnp.float32)

    def scores():
        k = split_heads(k_ref[0])             # (nh, ts, hd)
        return jnp.einsum("hqd,hkd->hqk", q_scr[...], k,
                          preferred_element_type=jnp.float32)

    def online_update(s):                     # s: (nh, tq, tk) f32
        m_prev = m_scr[...]
        m_new = jnp.maximum(m_prev, jnp.max(s, axis=-1, keepdims=True))
        alpha = jnp.exp(m_prev - m_new)
        p = jnp.exp(s - m_new)
        l_scr[...] = alpha * l_scr[...] + jnp.sum(p, axis=-1, keepdims=True)
        v = split_heads(v_ref[0])
        acc_scr[...] = alpha * acc_scr[...] + jnp.einsum(
            "hqk,hkd->hqd", p.astype(v.dtype), v,
            preferred_element_type=jnp.float32)
        m_scr[...] = m_new

    @pl.when(j < i)        # strictly below the diagonal: no mask work at all
    def _interior():
        online_update(scores())

    @pl.when(j == i)       # diagonal tile: local causal mask (tq == tk)
    def _diag():
        s = scores()
        tq, tk = s.shape[1], s.shape[2]
        row = lax.broadcasted_iota(jnp.int32, (tq, tk), 0)
        col = lax.broadcasted_iota(jnp.int32, (tq, tk), 1)
        online_update(jnp.where((row >= col)[None, :, :], s, _MASK_VALUE))

    # j > i tiles: compute skipped; their K/V DMA is also skipped via the
    # clamped index_map in _flash_attention.

    @pl.when(j == pl.num_programs(2) - 1)
    def _finalize():
        inv_l = pl.reciprocal(l_scr[...], approx=True)
        out = acc_scr[...] * inv_l                               # (nh, ts, hd) f32
        merged = jnp.concatenate([out[h] for h in range(nh)], axis=-1)   # (ts, C)
        o_ref[0] = merged.astype(o_ref.dtype)                    # lane-dense store


def _flash_attention(qkv, *, n_head, ts):
    """qkv: (B, T, 3C) with columns [q*scale | k | v]; returns (B, T, C)."""
    B, T, C3 = qkv.shape
    C = C3 // 3
    nh = n_head
    hd = C // nh
    n_tiles = T // ts
    kv_tiles = n_tiles * (n_tiles + 1) // 2     # computed (causal) tiles per batch
    isz = qkv.dtype.itemsize
    cost = pl.CostEstimate(
        flops=4 * B * nh * hd * ts * ts * kv_tiles,        # QK^T + PV, causal-halved
        transcendentals=B * nh * ts * ts * kv_tiles,       # exp
        bytes_accessed=isz * (B * T * C                    # q reads
                              + 2 * B * kv_tiles * ts * C  # k, v re-read per q tile
                              + B * T * C),                # output write
    )
    return pl.pallas_call(
        partial(_flash_kernel, nh=nh, hd=hd),
        out_shape=jax.ShapeDtypeStruct((B, T, C), qkv.dtype),
        grid_spec=pltpu.PrefetchScalarGridSpec(
            num_scalar_prefetch=0,
            grid=(B, n_tiles, n_tiles),
            in_specs=[
                # q / k / v are column blocks 0 / 1 / 2 of the (B, T, 3C) qkv
                # array; the k/v tile index is clamped to min(j, i) so fully
                # masked (future) tiles are never DMA'd.
                pl.BlockSpec((1, ts, C), lambda b, i, j: (b, i, 0)),
                pl.BlockSpec((1, ts, C), lambda b, i, j: (b, jnp.minimum(j, i), 1)),
                pl.BlockSpec((1, ts, C), lambda b, i, j: (b, jnp.minimum(j, i), 2)),
            ],
            out_specs=pl.BlockSpec((1, ts, C), lambda b, i, j: (b, i, 0)),
            scratch_shapes=[
                pltpu.VMEM((nh, ts, hd), qkv.dtype),    # cached per-head (scaled) q
                pltpu.VMEM((nh, ts, 1), jnp.float32),   # running max  m
                pltpu.VMEM((nh, ts, 1), jnp.float32),   # running sum  l
                pltpu.VMEM((nh, ts, hd), jnp.float32),  # output accumulator
            ],
        ),
        compiler_params=pltpu.CompilerParams(
            dimension_semantics=("parallel", "parallel", "arbitrary"),
            vmem_limit_bytes=_vmem_limit(),
        ),
        cost_estimate=cost,
    )(qkv, qkv, qkv)


# ---------------------------------------------------------------------------
# Full module forward
# ---------------------------------------------------------------------------
def causal_self_attention(x, w_attn, b_attn, w_proj, b_proj, *, n_head: int):
    """x: (B,T,C); w_attn: (3C,C); b_attn: (3C,); w_proj: (C,C); b_proj: (C,).

    Weights follow the PyTorch nn.Linear convention (out_features, in_features).
    """
    B, T, C = x.shape
    assert C % n_head == 0
    hd = C // n_head
    # Lane-dense head-merged layout: per-block column width C must be a
    # multiple of 128 (true for standard GPT widths 768/1024/1280/2048/...).
    assert C % 128 == 0, "n_embd must be a multiple of 128 for this kernel"
    # TODO(synk): pad the head-merged lane dim for n_embd not divisible by 128
    # (e.g. GPT-2 XL's 1600).

    dt = x.dtype
    scale = 1.0 / math.sqrt(hd)

    # Pre-transpose weights ONCE; fold the 1/sqrt(hd) attention scale into the
    # q-columns of the QKV weight/bias so no kernel ever multiplies by it.
    w_attn_t = jnp.asarray(w_attn, jnp.float32).T             # (C, 3C)
    w_attn_t = w_attn_t.at[:, :C].multiply(scale).astype(dt)
    b_attn2 = jnp.asarray(b_attn, jnp.float32).at[:C].multiply(scale).reshape(1, 3 * C)
    w_proj_t = jnp.asarray(w_proj).T.astype(dt)                # (C, C)
    b_proj2 = jnp.asarray(b_proj, jnp.float32).reshape(1, C)

    R = B * T
    tile_r = _row_tile(R, 512)     # linear row tiles
    ts = _row_tile(T, 256)         # attention q/kv tile (tq == tk)

    # Stage 1: fused QKV projection on the flattened (B*T, C) view (free reshape).
    qkv = _linear(x.reshape(R, C), w_attn_t, b_attn2,
                  tile_r=tile_r, tile_n=_col_tile(3 * C, C, dt.itemsize))
    qkv = qkv.reshape(B, T, 3 * C)                             # free reshape

    # Stage 2: flash causal attention directly on the (B, T, 3C) layout; the
    # output comes back head-merged as (B, T, C) -- no XLA transposes anywhere.
    y = _flash_attention(qkv, n_head=n_head, ts=ts)

    # Stage 3: output projection.
    out = _linear(y.reshape(R, C), w_proj_t, b_proj2,
                  tile_r=tile_r, tile_n=_col_tile(C, C, dt.itemsize))
    return out.reshape(B, T, C)


# ---------------------------------------------------------------------------
# Pure-JAX reference mirroring the PyTorch forward
# ---------------------------------------------------------------------------
def _reference(x, w_attn, b_attn, w_proj, b_proj, n_head):
    B, T, C = x.shape
    hd = C // n_head
    qkv = x @ w_attn.T + b_attn
    q, k, v = jnp.split(qkv, 3, axis=2)
    q = q.reshape(B, T, n_head, hd).transpose(0, 2, 1, 3)
    k = k.reshape(B, T, n_head, hd).transpose(0, 2, 1, 3)
    v = v.reshape(B, T, n_head, hd).transpose(0, 2, 1, 3)
    s = jnp.einsum("bhqd,bhkd->bhqk", q, k) / math.sqrt(hd)
    mask = jnp.tril(jnp.ones((T, T), dtype=bool))
    s = jnp.where(mask, s, -jnp.inf)
    p = jax.nn.softmax(s, axis=-1)
    y = jnp.einsum("bhqk,bhkd->bhqd", p, v)
    y = y.transpose(0, 2, 1, 3).reshape(B, T, C)
    return y @ w_proj.T + b_proj


if __name__ == "__main__":
    # Small config: batch=2, seq=512, n_embd=128, n_head=4 (head_dim=32).
    # T=512 with ts=256 exercises interior, diagonal, skipped-tile and
    # finalize paths of the flash kernel.
    B, T, C, n_head = 2, 512, 128, 4

    key = jax.random.PRNGKey(0)
    kx, k1, k2, k3, k4 = jax.random.split(key, 5)

    x = jax.random.normal(kx, (B, T, C), dtype=jnp.float32)
    w_attn = 0.02 * jax.random.normal(k1, (3 * C, C), dtype=jnp.float32)
    b_attn = 0.01 * jax.random.normal(k2, (3 * C,), dtype=jnp.float32)
    w_proj = 0.02 * jax.random.normal(k3, (C, C), dtype=jnp.float32)
    b_proj = 0.01 * jax.random.normal(k4, (C,), dtype=jnp.float32)

    out = causal_self_attention(x, w_attn, b_attn, w_proj, b_proj,
                                n_head=n_head)
    out = jax.block_until_ready(out)

    ref = _reference(x, w_attn, b_attn, w_proj, b_proj, n_head)
    assert out.shape == (B, T, C)
    # approx=True reciprocal in the softmax finalize -> allow small slack.
    err = jnp.max(jnp.abs(out - ref))
    assert jnp.allclose(out, ref, atol=2e-3, rtol=2e-2), f"max abs err {err}"

    print("KERNEL_OK")
</pallas_src>

<mosaic_0001>
module attributes {stable_mosaic.version = 11 : i64} {
  func.func @_linear_kernel(%arg0: i32, %arg1: i32, %arg2: memref<512x128xf32, #tpu.memory_space<vmem>>, %arg3: memref<128x384xf32, #tpu.memory_space<vmem>>, %arg4: memref<1x384xf32, #tpu.memory_space<vmem>>, %arg5: memref<512x384xf32, #tpu.memory_space<vmem>>) attributes {dimension_semantics = [#tpu.dimension_semantics<parallel>, #tpu.dimension_semantics<parallel>], iteration_bounds = array<i64: 2, 1>, scalar_prefetch = 0 : i64, scratch_operands = 0 : i64, tpu.core_type = #tpu.core_type<tc>, window_params = [{transform_indices = @transform_0, window_bounds = array<i64: 512, 128>}, {transform_indices = @transform_1, window_bounds = array<i64: 128, 384>}, {transform_indices = @transform_2, window_bounds = array<i64: 1, 384>}, {transform_indices = @transform_3, window_bounds = array<i64: 512, 384>}]} {
    %c0 = arith.constant 0 : index
    %c0_0 = arith.constant 0 : index
    %0 = vector.load %arg2[%c0, %c0_0] : memref<512x128xf32, #tpu.memory_space<vmem>>, vector<512x128xf32>
    %c0_1 = arith.constant 0 : index
    %c0_2 = arith.constant 0 : index
    %1 = vector.load %arg3[%c0_1, %c0_2] : memref<128x384xf32, #tpu.memory_space<vmem>>, vector<128x384xf32>
    %cst = arith.constant dense<0.000000e+00> : vector<512x384xf32>
    %2 = tpu.matmul %0, %1, %cst {dimension_numbers = #tpu.dot_dimension_numbers<[1], [0], [0], [1], [0, 0, 1, 1], [], []>} : vector<512x128xf32>, vector<128x384xf32>, vector<512x384xf32> -> vector<512x384xf32>
    %c0_3 = arith.constant 0 : index
    %c0_4 = arith.constant 0 : index
    %3 = vector.load %arg4[%c0_3, %c0_4] : memref<1x384xf32, #tpu.memory_space<vmem>>, vector<1x384xf32>
    %4 = vector.broadcast %3 : vector<1x384xf32> to vector<512x384xf32>
    %5 = arith.addf %2, %4 : vector<512x384xf32>
    %c0_5 = arith.constant 0 : index
    %c0_6 = arith.constant 0 : index
    %6 = vector.load %arg5[%c0_5, %c0_6] : memref<512x384xf32, #tpu.memory_space<vmem>>, vector<512x384xf32>
    tpu.vector_store %arg5[%c0_5, %c0_6], %5 {strides = array<i32>} : memref<512x384xf32, #tpu.memory_space<vmem>>, vector<512x384xf32>,
    return
  }
  func.func @transform_0(%arg0: i32, %arg1: i32) -> (i32, i32) {
    %c0_i32 = arith.constant 0 : i32
    %c0_i32_0 = arith.constant 0 : i32
    return %arg0, %c0_i32 : i32, i32
  }
  func.func @transform_1(%arg0: i32, %arg1: i32) -> (i32, i32) {
    %c0_i32 = arith.constant 0 : i32
    %c0_i32_0 = arith.constant 0 : i32
    return %c0_i32, %arg1 : i32, i32
  }
  func.func @transform_2(%arg0: i32, %arg1: i32) -> (i32, i32) {
    %c0_i32 = arith.constant 0 : i32
    %c0_i32_0 = arith.constant 0 : i32
    return %c0_i32, %arg1 : i32, i32
  }
  func.func @transform_3(%arg0: i32, %arg1: i32) -> (i32, i32) {
    %c0_i32 = arith.constant 0 : i32
    return %arg0, %arg1 : i32, i32
  }
}

</mosaic_0001>

<llo_original>
// kernel: tpu_custom_call.1
$region0: #{tpu_custom_call.1}
  #allocation0 [shape = 'u32[]', space=smem, size = 0x4, offset = 0x4, fixed_abs, tag = 'smem constant byte address 0x4 - core index']
  #allocation1 [shape = 'u32[144,128]{1,0:T(1,128)}', space=vmem, size = 0x12000, scoped, tag = 'internal scratch']
  %s0 = inlined_call_operand.hbm [shape: f32[1024,128], index: 0, kind: input, shape index: {}]
  %s1 = inlined_call_operand.hbm [shape: f32[128,384], index: 1, kind: input, shape index: {}]
  %s2 = inlined_call_operand.hbm [shape: f32[1,384], index: 2, kind: input, shape index: {}]
  %s3 = inlined_call_operand.hbm [shape: f32[1024,384], index: 3, kind: output, shape index: {}]
  %s4 = sld [smem:[#allocation0]]
  $region57: #{tpu_custom_call.1} parent=0
    _
  %s6 = ssub.s32 1, %s4
  %s7 = scalar_select 0, %s6, %s4
  $region1: #{tpu_custom_call.1} parent=0
    #allocation2 [shape = 'u8[524288]{0}', space=vmem, size = 0x80000, scoped, tag = 'input window, operand 0']
    #allocation3 [shape = 's32[2]{0}', space=sflag, size = 0x8, scoped, tag = 'scoped memory for tpu_custom_call.1']
    #allocation4 [shape = 's32[2]{0}', space=sflag, size = 0x8, scoped, tag = 'scoped memory for tpu_custom_call.1']
    #allocation5 [shape = 'u8[196608]{0}', space=vmem, size = 0x30000, scoped, tag = 'input window, operand 1, single buffered']
    #allocation6 [shape = 's32[1]{0}', space=sflag, size = 0x4, scoped, tag = 'scoped memory for tpu_custom_call.1']
    #allocation7 [shape = 'u8[1536]{0}', space=vmem, size = 0x800, scoped, tag = 'input window, operand 2, single buffered']
    #allocation8 [shape = 'u8[1572864]{0}', space=vmem, size = 0x180000, scoped, tag = 'output window, operand 0']
    %8 = vsyncpa [#allocation3], 0
    %s9 = scalar_lea.sflag [#allocation3], 1
    %10 = vsyncpa %s9, 0
    %11 = vsyncpa [#allocation6], 0
    %12 = vsyncpa [#allocation4], 0
    %s13 = scalar_lea.sflag [#allocation4], 1
    %14 = vsyncpa %s13, 0
    loop: start=0, step=1, limit=4
    $region2: #{tpu_custom_call.1} parent=1 // loop_pre_header
      _
    $region3: #{tpu_custom_call.1} parent=1 // loop_header
      %s16 = sphi 0, %s20
      %p17 = scmp.ge.s32.totalorder %s16, 4
      %s23 = sphi 0, %s35
      %s24 = sphi 0, %s31
      %s25 = sphi 0, %s23
      %s26 = sphi 0, %s24
      %s27 = sphi 0, %s25
      %s28 = sphi 0, %s26
      %s38 = sphi 0, %s40
      %s41 = sphi 0, %s38
      %s42 = sphi 0, %s41
      %s58 = sphi 0, %s42
      %s64 = sphi 0, %s66
      %s67 = sphi 0, %s64
      %s68 = sphi 0, %s67
      %s84 = sphi 0, %s68
      %s90 = sphi 0, %s92
      %s93 = sphi 0, %s90
      %s94 = sphi 0, %s93
      %s110 = sphi 0, %s94
      %s118 = sphi 0, %s120
      %s121 = sphi 0, %s118
      %s122 = sphi 0, %s121
      %s138 = sphi 0, %s122
    $region4: #{tpu_custom_call.1} parent=1 // loop_header_branch
      %19 = sbr.rel (%p17) target = $region8
    $region5: #{tpu_custom_call.1} parent=1 // loop_body
      %s21 = ssub.s32 %s16, 1
      %s22 = ssub.s32 %s16, 2
      %s29 = sadd.s32 1, %s24
      %p30 = scmp.ge.s32.totalorder %s29, 1
      %s31 = scalar_select %p30, 0, %s29
      %s32 = sadd.s32 1, %s23
      %s33 = scalar_select %p30, %s32, %s23
      %p34 = scmp.ge.s32.totalorder %s33, 2
      %s35 = scalar_select %p34, 0, %s33
      %s36 = ssub.s32 %s23, %s35
      %p37 = scmp.eq.s32.totalorder %s36, 0
      %s39 = sadd.s32 %s38, 1
      %s40 = scalar_select %p37, %s38, %s39
      %p43 = pneg %p37
      %p44 = scmp.eq.s32.totalorder %s16, 1
      %p45 = por %p43, %p44
      %p46 = scmp.ne.s32.totalorder %s38, %s41
      %p47 = scmp.eq.s32.totalorder %s16, 0
      %p48 = por %p46, %p47
      %p49 = scmp.ne.s32.totalorder %s38, %s41
      %p50 = scmp.eq.s32.totalorder %s21, 1
      %p51 = por %p49, %p50
      %p52 = scmp.ne.s32.totalorder %s41, %s42
      %p53 = scmp.eq.s32.totalorder %s21, 0
      %p54 = por %p52, %p53
      %p55 = scmp.ne.s32.totalorder %s41, %s42
      %p56 = scmp.eq.s32.totalorder %s22, 1
      %p57 = por %p55, %p56
      %p59 = scmp.ne.s32.totalorder %s42, %s58
      %p60 = scmp.eq.s32.totalorder %s22, 0
      %p61 = por %p59, %p60
      %s62 = ssub.s32 %s24, %s31
      %p63 = scmp.eq.s32.totalorder %s62, 0
      %s65 = sadd.s32 %s64, 1
      %s66 = scalar_select %p63, %s64, %s65
      %p69 = pneg %p63
      %p70 = scmp.eq.s32.totalorder %s16, 1
      %p71 = por %p69, %p70
      %p72 = scmp.ne.s32.totalorder %s64, %s67
      %p73 = scmp.eq.s32.totalorder %s16, 0
      %p74 = por %p72, %p73
      %p75 = scmp.ne.s32.totalorder %s64, %s67
      %p76 = scmp.eq.s32.totalorder %s21, 1
      %p77 = por %p75, %p76
      %p78 = scmp.ne.s32.totalorder %s67, %s68
      %p79 = scmp.eq.s32.totalorder %s21, 0
      %p80 = por %p78, %p79
      %p81 = scmp.ne.s32.totalorder %s67, %s68
      %p82 = scmp.eq.s32.totalorder %s22, 1
      %p83 = por %p81, %p82
      %p85 = scmp.ne.s32.totalorder %s68, %s84
      %p86 = scmp.eq.s32.totalorder %s22, 0
      %p87 = por %p85, %p86
      %s88 = ssub.s32 %s24, %s31
      %p89 = scmp.eq.s32.totalorder %s88, 0
      %s91 = sadd.s32 %s90, 1
      %s92 = scalar_select %p89, %s90, %s91
      %p95 = pneg %p89
      %p96 = scmp.eq.s32.totalorder %s16, 1
      %p97 = por %p95, %p96
      %p98 = scmp.ne.s32.totalorder %s90, %s93
      %p99 = scmp.eq.s32.totalorder %s16, 0
      %p100 = por %p98, %p99
      %p101 = scmp.ne.s32.totalorder %s90, %s93
      %p102 = scmp.eq.s32.totalorder %s21, 1
      %p103 = por %p101, %p102
      %p104 = scmp.ne.s32.totalorder %s93, %s94
      %p105 = scmp.eq.s32.totalorder %s21, 0
      %p106 = por %p104, %p105
      %p107 = scmp.ne.s32.totalorder %s93, %s94
      %p108 = scmp.eq.s32.totalorder %s22, 1
      %p109 = por %p107, %p108
      %p111 = scmp.ne.s32.totalorder %s94, %s110
      %p112 = scmp.eq.s32.totalorder %s22, 0
      %p113 = por %p111, %p112
      %s114 = ssub.s32 %s23, %s35
      %s115 = ssub.s32 %s24, %s31
      %s116 = sor.u32 %s114, %s115
      %p117 = scmp.eq.s32.totalorder %s116, 0
      %s119 = sadd.s32 %s118, 1
      %s120 = scalar_select %p117, %s118, %s119
      %p123 = pneg %p117
      %p124 = scmp.eq.s32.totalorder %s16, 1
      %p125 = por %p123, %p124
      %p126 = scmp.ne.s32.totalorder %s118, %s121
      %p127 = scmp.eq.s32.totalorder %s16, 0
      %p128 = por %p126, %p127
      %p129 = scmp.ne.s32.totalorder %s118, %s121
      %p130 = scmp.eq.s32.totalorder %s21, 1
      %p131 = por %p129, %p130
      %p132 = scmp.ne.s32.totalorder %s121, %s122
      %p133 = scmp.eq.s32.totalorder %s21, 0
      %p134 = por %p132, %p133
      %p135 = scmp.ne.s32.totalorder %s121, %s122
      %p136 = scmp.eq.s32.totalorder %s22, 1
      %p137 = por %p135, %p136
      %p139 = scmp.ne.s32.totalorder %s122, %s138
      %p140 = scmp.eq.s32.totalorder %s22, 0
      %p141 = por %p139, %p140
      %p142 = scmp.le.s32.totalorder 1, %s16
      %p143 = scmp.lt.s32.totalorder %s16, 3
      %p144 = pnand %p142, %p143
      %p145 = pneg %p144
      // Predicated region
      $region9: #{tpu_custom_call.1} parent=5 // pred_check
        _
      $region10: #{tpu_custom_call.1} parent=5 // pred_check_branch
        %147 = sbr.rel (%p144) target = $region12
      $region11: #{tpu_custom_call.1} parent=5 // pred_region
        %s148 = ssub.s32 %s16, 1
        // Predicated region
        $region13: #{tpu_custom_call.1} parent=11 // pred_check
          %p149 = pneg %p80
        $region14: #{tpu_custom_call.1} parent=11 // pred_check_branch
          %151 = sbr.rel (%p149) target = $region16
        $region15: #{tpu_custom_call.1} parent=11 // pred_region
          %s152 = smul.u32 3, %s26
          %s154 = ssub.s32 6144, 6144
          %155 = vsyncadd [#allocation6], %s154
          %s156 = smul.addr %s152, 128
          %s157 = scalar_lea.hbm %s1, %s156
          %s158 = sshll.u32 [#allocation5], 4
          %s159 = int_to_ptr.vmem [resolvable:$true] %s158
          %164 = dma.hbm_to_vmem [thread:$0]  %s157, 6144, %s159, [#allocation6], 384, 384, 24
        $region16: #{tpu_custom_call.1} parent=11 // pred_fallthru
          _
        // Predicated region
        $region17: #{tpu_custom_call.1} parent=11 // pred_check
          %p165 = pneg %p106
        $region18: #{tpu_custom_call.1} parent=11 // pred_check_branch
          %167 = sbr.rel (%p165) target = $region20
        $region19: #{tpu_custom_call.1} parent=11 // pred_region
          %s168 = smul.u32 3, %s26
          %s170 = ssub.s32 48, 48
          %171 = vsyncadd [#allocation6], %s170
          %s172 = smul.addr %s168, 16
          %s173 = scalar_lea.hbm %s2, %s172
          %s175 = sshll.u32 [#allocation7], 4
          %s176 = int_to_ptr.vmem [resolvable:$true] %s175
          %178 = dma.hbm_to_vmem [thread:$0]  %s173, 48, %s176, [#allocation6]
        $region20: #{tpu_custom_call.1} parent=11 // pred_fallthru
          _
      $region12: #{tpu_custom_call.1} parent=5 // pred_fallthru
        _
      %p179 = scmp.lt.s32.totalorder %s16, 2
      // Predicated region
      $region21: #{tpu_custom_call.1} parent=5 // pred_check
        %p180 = pneg %p179
      $region22: #{tpu_custom_call.1} parent=5 // pred_check_branch
        %182 = sbr.rel (%p180) target = $region24
      $region23: #{tpu_custom_call.1} parent=5 // pred_region
        // Predicated region
        $region25: #{tpu_custom_call.1} parent=23 // pred_check
          %p183 = pneg %p48
        $region26: #{tpu_custom_call.1} parent=23 // pred_check_branch
          %185 = sbr.rel (%p183) target = $region28
        $region27: #{tpu_custom_call.1} parent=23 // pred_region
          %s186 = sand.u32 %s38, 1
          %s187 = scalar_lea.sflag [#allocation3], %s186
          %s188 = sand.u32 %s38, 1
          %s189 = smul.addr %s188, 512
          %s190 = scalar_lea.vmem [#allocation2], %s189
          %s191 = smul.u32 64, %s23
          %s193 = ssub.s32 8192, 8192
          %194 = vsyncadd %s187, %s193
          %s195 = smul.addr %s191, 128
          %s196 = scalar_lea.hbm %s0, %s195
          %s197 = sshll.u32 %s190, 4
          %s198 = int_to_ptr.vmem [resolvable:$true] %s197
          %203 = dma.hbm_to_vmem [thread:$0]  %s196, 8192, %s198, %s187, 128, 128, 8
        $region28: #{tpu_custom_call.1} parent=23 // pred_fallthru
          _
      $region24: #{tpu_custom_call.1} parent=5 // pred_fallthru
        _
      %p204 = scmp.le.s32.totalorder 1, %s16
      %p205 = scmp.lt.s32.totalorder %s16, 3
      %p206 = pnand %p204, %p205
      %p207 = pneg %p206
      // Predicated region
      $region29: #{tpu_custom_call.1} parent=5 // pred_check
        _
      $region30: #{tpu_custom_call.1} parent=5 // pred_check_branch
        %209 = sbr.rel (%p206) target = $region32
      $region31: #{tpu_custom_call.1} parent=5 // pred_region
        %s210 = ssub.s32 %s16, 1
        %s211 = sand.u32 %s41, 1
        %s212 = scalar_lea.sflag [#allocation3], %s211
        %s213 = sand.u32 %s41, 1
        %s214 = smul.addr %s213, 512
        %s215 = scalar_lea.vmem [#allocation2], %s214
        // Predicated region
        $region33: #{tpu_custom_call.1} parent=31 // pred_check
          %p216 = pneg %p54
        $region34: #{tpu_custom_call.1} parent=31 // pred_check_branch
          %218 = sbr.rel (%p216) target = $region36
        $region35: #{tpu_custom_call.1} parent=31 // pred_region
          %219 = dma.done %s212, 8192
        $region36: #{tpu_custom_call.1} parent=31 // pred_fallthru
          _
        // Predicated region
        $region37: #{tpu_custom_call.1} parent=31 // pred_check
          %p220 = pneg %p80
        $region38: #{tpu_custom_call.1} parent=31 // pred_check_branch
          %222 = sbr.rel (%p220) target = $region40
        $region39: #{tpu_custom_call.1} parent=31 // pred_region
          %223 = dma.done [#allocation6], 6144
        $region40: #{tpu_custom_call.1} parent=31 // pred_fallthru
          _
        // Predicated region
        $region41: #{tpu_custom_call.1} parent=31 // pred_check
          %p224 = pneg %p106
        $region42: #{tpu_custom_call.1} parent=31 // pred_check_branch
          %226 = sbr.rel (%p224) target = $region44
        $region43: #{tpu_custom_call.1} parent=31 // pred_region
          %227 = dma.done [#allocation6], 48
        $region44: #{tpu_custom_call.1} parent=31 // pred_fallthru
          _
        %s228 = sand.u32 %s41, 1
        %s229 = scalar_lea.sflag [#allocation3], %s228
        %s230 = sand.u32 %s41, 1
        %s231 = smul.addr %s230, 512
        %s232 = scalar_lea.vmem [#allocation2], %s231
        %p233 = pneg %p54
        %p234 = pneg %p51
        %p235 = pneg %p80
        %p236 = pneg %p77
        %p237 = pneg %p106
        %p238 = pneg %p103
        %p239 = pneg %p134
        %p240 = pneg %p131
        %s241 = sand.u32 %s121, 1
        %s242 = scalar_lea.sflag [#allocation4], %s241
        %s243 = sand.u32 %s121, 1
        %s244 = smul.addr %s243, 1536
        %s245 = scalar_lea.vmem [#allocation8], %s244
        %s246 = smul.u32 64, %s25
        %s247 = smul.u32 3, %s26
        %s248 = smul.u32 3, %s26
        %s249 = smul.u32 64, %s25
        %s250 = smul.u32 3, %s26
        %v251 = vld [vmem:[%s215] sm:$0xff]
        %v252 = vld [vmem:[%s215 + $0x8] sm:$0xff]
        %v253 = vld [vmem:[%s215 + $0x10] sm:$0xff]
        %v254 = vld [vmem:[%s215 + $0x18] sm:$0xff]
        %v255 = vld [vmem:[%s215 + $0x20] sm:$0xff]
        %v256 = vld [vmem:[%s215 + $0x28] sm:$0xff]
        %v257 = vld [vmem:[%s215 + $0x30] sm:$0xff]
        %v258 = vld [vmem:[%s215 + $0x38] sm:$0xff]
        %v259 = vld [vmem:[%s215 + $0x40] sm:$0xff]
        %v260 = vld [vmem:[%s215 + $0x48] sm:$0xff]
        %v261 = vld [vmem:[%s215 + $0x50] sm:$0xff]
        %v262 = vld [vmem:[%s215 + $0x58] sm:$0xff]
        %v263 = vld [vmem:[%s215 + $0x60] sm:$0xff]
        %v264 = vld [vmem:[%s215 + $0x68] sm:$0xff]
        %v265 = vld [vmem:[%s215 + $0x70] sm:$0xff]
        %v266 = vld [vmem:[%s215 + $0x78] sm:$0xff]
        %v267 = vld [vmem:[%s215 + $0x80] sm:$0xff]
        %v268 = vld [vmem:[%s215 + $0x88] sm:$0xff]
        %v269 = vld [vmem:[%s215 + $0x90] sm:$0xff]
        %v270 = vld [vmem:[%s215 + $0x98] sm:$0xff]
        %v271 = vld [vmem:[%s215 + $0xa0] sm:$0xff]
        %v272 = vld [vmem:[%s215 + $0xa8] sm:$0xff]
        %v273 = vld [vmem:[%s215 + $0xb0] sm:$0xff]
        %v274 = vld [vmem:[%s215 + $0xb8] sm:$0xff]
        %v275 = vld [vmem:[%s215 + $0xc0] sm:$0xff]
        %v276 = vld [vmem:[%s215 + $0xc8] sm:$0xff]
        %v277 = vld [vmem:[%s215 + $0xd0] sm:$0xff]
        %v278 = vld [vmem:[%s215 + $0xd8] sm:$0xff]
        %v279 = vld [vmem:[%s215 + $0xe0] sm:$0xff]
        %v280 = vld [vmem:[%s215 + $0xe8] sm:$0xff]
        %v281 = vld [vmem:[%s215 + $0xf0] sm:$0xff]
        %v282 = vld [vmem:[%s215 + $0xf8] sm:$0xff]
        %v283 = vld [vmem:[%s215 + $0x100] sm:$0xff]
        %v284 = vld [vmem:[%s215 + $0x108] sm:$0xff]
        %v285 = vld [vmem:[%s215 + $0x110] sm:$0xff]
        %v286 = vld [vmem:[%s215 + $0x118] sm:$0xff]
        %v287 = vld [vmem:[%s215 + $0x120] sm:$0xff]
        %v288 = vld [vmem:[%s215 + $0x128] sm:$0xff]
        %v289 = vld [vmem:[%s215 + $0x130] sm:$0xff]
        %v290 = vld [vmem:[%s215 + $0x138] sm:$0xff]
        %v291 = vld [vmem:[%s215 + $0x140] sm:$0xff]
        %v292 = vld [vmem:[%s215 + $0x148] sm:$0xff]
        %v293 = vld [vmem:[%s215 + $0x150] sm:$0xff]
        %v294 = vld [vmem:[%s215 + $0x158] sm:$0xff]
        %v295 = vld [vmem:[%s215 + $0x160] sm:$0xff]
        %v296 = vld [vmem:[%s215 + $0x168] sm:$0xff]
        %v297 = vld [vmem:[%s215 + $0x170] sm:$0xff]
        %v298 = vld [vmem:[%s215 + $0x178] sm:$0xff]
        %v299 = vld [vmem:[%s215 + $0x180] sm:$0xff]
        %v300 = vld [vmem:[%s215 + $0x188] sm:$0xff]
        %v301 = vld [vmem:[%s215 + $0x190] sm:$0xff]
        %v302 = vld [vmem:[%s215 + $0x198] sm:$0xff]
        %v303 = vld [vmem:[%s215 + $0x1a0] sm:$0xff]
        %v304 = vld [vmem:[%s215 + $0x1a8] sm:$0xff]
        %v305 = vld [vmem:[%s215 + $0x1b0] sm:$0xff]
        %v306 = vld [vmem:[%s215 + $0x1b8] sm:$0xff]
        %v307 = vld [vmem:[%s215 + $0x1c0] sm:$0xff]
        %v308 = vld [vmem:[%s215 + $0x1c8] sm:$0xff]
        %v309 = vld [vmem:[%s215 + $0x1d0] sm:$0xff]
        %v310 = vld [vmem:[%s215 + $0x1d8] sm:$0xff]
        %v311 = vld [vmem:[%s215 + $0x1e0] sm:$0xff]
        %v312 = vld [vmem:[%s215 + $0x1e8] sm:$0xff]
        %v313 = vld [vmem:[%s215 + $0x1f0] sm:$0xff]
        %v314 = vld [vmem:[%s215 + $0x1f8] sm:$0xff]
        %v315 = vld [vmem:[#allocation5] sm:$0xff]
        %v316 = vld [vmem:[#allocation5 + $0x8] sm:$0xff]
        %v317 = vld [vmem:[#allocation5 + $0x10] sm:$0xff]
        %v318 = vld [vmem:[#allocation5 + $0x18] sm:$0xff]
        %v319 = vld [vmem:[#allocation5 + $0x20] sm:$0xff]
        %v320 = vld [vmem:[#allocation5 + $0x28] sm:$0xff]
        %v321 = vld [vmem:[#allocation5 + $0x30] sm:$0xff]
        %v322 = vld [vmem:[#allocation5 + $0x38] sm:$0xff]
        %v323 = vld [vmem:[#allocation5 + $0x40] sm:$0xff]
        %v324 = vld [vmem:[#allocation5 + $0x48] sm:$0xff]
        %v325 = vld [vmem:[#allocation5 + $0x50] sm:$0xff]
        %v326 = vld [vmem:[#allocation5 + $0x58] sm:$0xff]
        %v327 = vld [vmem:[#allocation5 + $0x60] sm:$0xff]
        %v328 = vld [vmem:[#allocation5 + $0x68] sm:$0xff]
        %v329 = vld [vmem:[#allocation5 + $0x70] sm:$0xff]
        %v330 = vld [vmem:[#allocation5 + $0x78] sm:$0xff]
        %v331 = vld [vmem:[#allocation5 + $0x80] sm:$0xff]
        %v332 = vld [vmem:[#allocation5 + $0x88] sm:$0xff]
        %v333 = vld [vmem:[#allocation5 + $0x90] sm:$0xff]
        %v334 = vld [vmem:[#allocation5 + $0x98] sm:$0xff]
        %v335 = vld [vmem:[#allocation5 + $0xa0] sm:$0xff]
        %v336 = vld [vmem:[#allocation5 + $0xa8] sm:$0xff]
        %v337 = vld [vmem:[#allocation5 + $0xb0] sm:$0xff]
        %v338 = vld [vmem:[#allocation5 + $0xb8] sm:$0xff]
        %v339 = vld [vmem:[#allocation5 + $0xc0] sm:$0xff]
        %v340 = vld [vmem:[#allocation5 + $0xc8] sm:$0xff]
        %v341 = vld [vmem:[#allocation5 + $0xd0] sm:$0xff]
        %v342 = vld [vmem:[#allocation5 + $0xd8] sm:$0xff]
        %v343 = vld [vmem:[#allocation5 + $0xe0] sm:$0xff]
        %v344 = vld [vmem:[#allocation5 + $0xe8] sm:$0xff]
        %v345 = vld [vmem:[#allocation5 + $0xf0] sm:$0xff]
        %v346 = vld [vmem:[#allocation5 + $0xf8] sm:$0xff]
        %v347 = vld [vmem:[#allocation5 + $0x100] sm:$0xff]
        %v348 = vld [vmem:[#allocation5 + $0x108] sm:$0xff]
        %v349 = vld [vmem:[#allocation5 + $0x110] sm:$0xff]
        %v350 = vld [vmem:[#allocation5 + $0x118] sm:$0xff]
        %v351 = vld [vmem:[#allocation5 + $0x120] sm:$0xff]
        %v352 = vld [vmem:[#allocation5 + $0x128] sm:$0xff]
        %v353 = vld [vmem:[#allocation5 + $0x130] sm:$0xff]
        %v354 = vld [vmem:[#allocation5 + $0x138] sm:$0xff]
        %v355 = vld [vmem:[#allocation5 + $0x140] sm:$0xff]
        %v356 = vld [vmem:[#allocation5 + $0x148] sm:$0xff]
        %v357 = vld [vmem:[#allocation5 + $0x150] sm:$0xff]
        %v358 = vld [vmem:[#allocation5 + $0x158] sm:$0xff]
        %v359 = vld [vmem:[#allocation5 + $0x160] sm:$0xff]
        %v360 = vld [vmem:[#allocation5 + $0x168] sm:$0xff]
        %v361 = vld [vmem:[#allocation5 + $0x170] sm:$0xff]
        %v362 = vld [vmem:[#allocation5 + $0x178] sm:$0xff]
        %v363 = vld [vmem:[#allocation7] sm:$0x7]
        %v365 = vlaneseq
        %v366 = vshrl.u32 %v365, 7
        %v367 = vsub.s32 0, %v366
        %v368 = vrot.slane %v363, %v367
        %v369 = vlaneseq
        %v370 = vshrl.u32 %v369, 7
        %v371 = vsub.s32 1, %v370
        %v372 = vrot.slane %v363, %v371
        %v373 = vlaneseq
        %v374 = vshrl.u32 %v373, 7
        %v375 = vsub.s32 2, %v374
        %v376 = vrot.slane %v363, %v375
        %380 = vmatprep.subr.mxu0 %v316
        %381 = vmatpush1.msra.mxu0 %v315
        %382 = vmatprep.subr.mxu0 %v319
        %383 = vmatpush1.msra.mxu0 %v318
        %384 = vmatprep.subr.mxu0 %v322
        %385 = vmatpush1.msra.mxu0 %v321
        %386 = vmatprep.subr.mxu0 %v325
        %387 = vmatpush1.msra.mxu0 %v324
        %388 = vmatprep.subr.mxu0 %v328
        %389 = vmatpush1.msra.mxu0 %v327
        %390 = vmatprep.subr.mxu0 %v331
        %391 = vmatpush1.msra.mxu0 %v330
        %392 = vmatprep.subr.mxu0 %v334
        %393 = vmatpush1.msra.mxu0 %v333
        %394 = vmatprep.subr.mxu0 %v337
        %395 = vmatpush1.msra.mxu0 %v336
        %396 = vmatprep.subr.mxu0 %v340
        %397 = vmatpush1.msra.mxu0 %v339
        %398 = vmatprep.subr.mxu0 %v343
        %399 = vmatpush1.msra.mxu0 %v342
        %400 = vmatprep.subr.mxu0 %v346
        %401 = vmatpush1.msra.mxu0 %v345
        %402 = vmatprep.subr.mxu0 %v349
        %403 = vmatpush1.msra.mxu0 %v348
        %404 = vmatprep.subr.mxu0 %v352
        %405 = vmatpush1.msra.mxu0 %v351
        %406 = vmatprep.subr.mxu0 %v355
        %407 = vmatpush1.msra.mxu0 %v354
        %408 = vmatprep.subr.mxu0 %v358
        %409 = vmatpush1.msra.mxu0 %v357
        %410 = vmatprep.subr.mxu0 %v361
        %411 = vmatpush1.msra.mxu0 %v360
        %412 = vmatprep.subr.mxu0 0.0
        %413 = vmatpush1.msra.mxu0 0.0
        %414 = vmatprep.subr.mxu0 0.0
        %415 = vmatpush1.msra.mxu0 0.0
        %416 = vmatprep.subr.mxu0 0.0
        %417 = vmatpush1.msra.mxu0 0.0
        %418 = vmatprep.subr.mxu0 0.0
        %419 = vmatpush1.msra.mxu0 0.0
        %420 = vmatprep.subr.mxu0 0.0
        %421 = vmatpush1.msra.mxu0 0.0
        %422 = vmatprep.subr.mxu0 0.0
        %423 = vmatpush1.msra.mxu0 0.0
        %424 = vmatprep.subr.mxu0 0.0
        %425 = vmatpush1.msra.mxu0 0.0
        %426 = vmatprep.subr.mxu0 0.0
        %427 = vmatpush1.msra.mxu0 0.0
        %428 = vmatprep.subr.mxu0 0.0
        %429 = vmatpush1.msra.mxu0 0.0
        %430 = vmatprep.subr.mxu0 0.0
        %431 = vmatpush1.msra.mxu0 0.0
        %432 = vmatprep.subr.mxu0 0.0
        %433 = vmatpush1.msra.mxu0 0.0
        %434 = vmatprep.subr.mxu0 0.0
        %435 = vmatpush1.msra.mxu0 0.0
        %436 = vmatprep.subr.mxu0 0.0
        %437 = vmatpush1.msra.mxu0 0.0
        %438 = vmatprep.subr.mxu0 0.0
        %439 = vmatpush1.msra.mxu0 0.0
        %440 = vmatprep.subr.mxu0 0.0
        %441 = vmatpush1.msra.mxu0 0.0
        %442 = vmatprep.subr.mxu0 0.0
        %443 = vmatpush1.msra.mxu0 0.0
        %444 = vmatprep.mubr.f32.mxu0 0.0
        %445 = vmatmul.mubr.f32.gmra.mrb[0].mxu0 %v251
        %v446 = vpop.f32.mrb[0].mxu0
        %v447 = vadd.f32 %v368, %v446
        %v448 = vpop.f32.mrb[0].mxu0
        %v449 = vadd.f32 %v372, %v448
        %450 = vmatprep.mubr.f32.mxu0 0.0
        %451 = vmatmul.mubr.f32.gmra.mrb[0].mxu0 %v252
        %v452 = vpop.f32.mrb[0].mxu0
        %v453 = vadd.f32 %v368, %v452
        %v454 = vpop.f32.mrb[0].mxu0
        %v455 = vadd.f32 %v372, %v454
        %456 = vmatprep.mubr.f32.mxu0 0.0
        %457 = vmatmul.mubr.f32.gmra.mrb[0].mxu0 %v253
        %v458 = vpop.f32.mrb[0].mxu0
        %v459 = vadd.f32 %v368, %v458
        %v460 = vpop.f32.mrb[0].mxu0
        %v461 = vadd.f32 %v372, %v460
        %462 = vmatprep.mubr.f32.mxu0 0.0
        %463 = vmatmul.mubr.f32.gmra.mrb[0].mxu0 %v254
        %v464 = vpop.f32.mrb[0].mxu0
        %v465 = vadd.f32 %v368, %v464
        %v466 = vpop.f32.mrb[0].mxu0
        %v467 = vadd.f32 %v372, %v466
        %468 = vmatprep.mubr.f32.mxu0 0.0
        %469 = vmatmul.mubr.f32.gmra.mrb[0].mxu0 %v255
        %v470 = vpop.f32.mrb[0].mxu0
        %v471 = vadd.f32 %v368, %v470
        %v472 = vpop.f32.mrb[0].mxu0
        %v473 = vadd.f32 %v372, %v472
        %474 = vmatprep.mubr.f32.mxu0 0.0
        %475 = vmatmul.mubr.f32.gmra.mrb[0].mxu0 %v256
        %v476 = vpop.f32.mrb[0].mxu0
        %v477 = vadd.f32 %v368, %v476
        %v478 = vpop.f32.mrb[0].mxu0
        %v479 = vadd.f32 %v372, %v478
        %480 = vmatprep.mubr.f32.mxu0 0.0
        %481 = vmatmul.mubr.f32.gmra.mrb[0].mxu0 %v257
        %v482 = vpop.f32.mrb[0].mxu0
        %v483 = vadd.f32 %v368, %v482
        %v484 = vpop.f32.mrb[0].mxu0
        %v485 = vadd.f32 %v372, %v484
        %486 = vmatprep.mubr.f32.mxu0 0.0
        %487 = vmatmul.mubr.f32.gmra.mrb[0].mxu0 %v258
        %v488 = vpop.f32.mrb[0].mxu0
        %v489 = vadd.f32 %v368, %v488
        %v490 = vpop.f32.mrb[0].mxu0
        %v491 = vadd.f32 %v372, %v490
        %492 = vmatprep.mubr.f32.mxu0 0.0
        %493 = vmatmul.mubr.f32.gmra.mrb[0].mxu0 %v259
        %v494 = vpop.f32.mrb[0].mxu0
        %v495 = vadd.f32 %v368, %v494
        %v496 = vpop.f32.mrb[0].mxu0
        %v497 = vadd.f32 %v372, %v496
        %498 = vmatprep.mubr.f32.mxu0 0.0
        %499 = vmatmul.mubr.f32.gmra.mrb[0].mxu0 %v260
        %v500 = vpop.f32.mrb[0].mxu0
        %v501 = vadd.f32 %v368, %v500
        %v502 = vpop.f32.mrb[0].mxu0
        %v503 = vadd.f32 %v372, %v502
        %504 = vmatprep.mubr.f32.mxu0 0.0
        %505 = vmatmul.mubr.f32.gmra.mrb[0].mxu0 %v261
        %v506 = vpop.f32.mrb[0].mxu0
        %v507 = vadd.f32 %v368, %v506
        %v508 = vpop.f32.mrb[0].mxu0
        %v509 = vadd.f32 %v372, %v508
        %510 = vmatprep.mubr.f32.mxu0 0.0
        %511 = vmatmul.mubr.f32.gmra.mrb[0].mxu0 %v262
        %v512 = vpop.f32.mrb[0].mxu0
        %v513 = vadd.f32 %v368, %v512
        %v514 = vpop.f32.mrb[0].mxu0
        %v515 = vadd.f32 %v372, %v514
        %516 = vmatprep.mubr.f32.mxu0 0.0
        %517 = vmatmul.mubr.f32.gmra.mrb[0].mxu0 %v263
        %v518 = vpop.f32.mrb[0].mxu0
        %v519 = vadd.f32 %v368, %v518
        %v520 = vpop.f32.mrb[0].mxu0
        %v521 = vadd.f32 %v372, %v520
        %522 = vmatprep.mubr.f32.mxu0 0.0
        %523 = vmatmul.mubr.f32.gmra.mrb[0].mxu0 %v264
        %v524 = vpop.f32.mrb[0].mxu0
        %v525 = vadd.f32 %v368, %v524
        %v526 = vpop.f32.mrb[0].mxu0
        %v527 = vadd.f32 %v372, %v526
        %528 = vmatprep.mubr.f32.mxu0 0.0
        %529 = vmatmul.mubr.f32.gmra.mrb[0].mxu0 %v265
        %v530 = vpop.f32.mrb[0].mxu0
        %v531 = vadd.f32 %v368, %v530
        %v532 = vpop.f32.mrb[0].mxu0
        %v533 = vadd.f32 %v372, %v532
        %534 = vmatprep.mubr.f32.mxu0 0.0
        %535 = vmatmul.mubr.f32.gmra.mrb[0].mxu0 %v266
        %v536 = vpop.f32.mrb[0].mxu0
        %v537 = vadd.f32 %v368, %v536
        %v538 = vpop.f32.mrb[0].mxu0
        %v539 = vadd.f32 %v372, %v538
        %540 = vmatprep.mubr.f32.mxu0 0.0
        %541 = vmatmul.mubr.f32.gmra.mrb[0].mxu0 %v267
        %v542 = vpop.f32.mrb[0].mxu0
        %v543 = vadd.f32 %v368, %v542
        %v544 = vpop.f32.mrb[0].mxu0
        %v545 = vadd.f32 %v372, %v544
        %546 = vmatprep.mubr.f32.mxu0 0.0
        %547 = vmatmul.mubr.f32.gmra.mrb[0].mxu0 %v268
        %v548 = vpop.f32.mrb[0].mxu0
        %v549 = vadd.f32 %v368, %v548
        %v550 = vpop.f32.mrb[0].mxu0
        %v551 = vadd.f32 %v372, %v550
        %552 = vmatprep.mubr.f32.mxu0 0.0
        %553 = vmatmul.mubr.f32.gmra.mrb[0].mxu0 %v269
        %v554 = vpop.f32.mrb[0].mxu0
        %v555 = vadd.f32 %v368, %v554
        %v556 = vpop.f32.mrb[0].mxu0
        %v557 = vadd.f32 %v372, %v556
        %558 = vmatprep.mubr.f32.mxu0 0.0
        %559 = vmatmul.mubr.f32.gmra.mrb[0].mxu0 %v270
        %v560 = vpop.f32.mrb[0].mxu0
        %v561 = vadd.f32 %v368, %v560
        %v562 = vpop.f32.mrb[0].mxu0
        %v563 = vadd.f32 %v372, %v562
        %564 = vmatprep.mubr.f32.mxu0 0.0
        %565 = vmatmul.mubr.f32.gmra.mrb[0].mxu0 %v271
        %v566 = vpop.f32.mrb[0].mxu0
        %v567 = vadd.f32 %v368, %v566
        %v568 = vpop.f32.mrb[0].mxu0
        %v569 = vadd.f32 %v372, %v568
        %570 = vmatprep.mubr.f32.mxu0 0.0
        %571 = vmatmul.mubr.f32.gmra.mrb[0].mxu0 %v272
        %v572 = vpop.f32.mrb[0].mxu0
        %v573 = vadd.f32 %v368, %v572
        %v574 = vpop.f32.mrb[0].mxu0
        %v575 = vadd.f32 %v372, %v574
        %576 = vmatprep.mubr.f32.mxu0 0.0
        %577 = vmatmul.mubr.f32.gmra.mrb[0].mxu0 %v273
        %v578 = vpop.f32.mrb[0].mxu0
        %v579 = vadd.f32 %v368, %v578
        %v580 = vpop.f32.mrb[0].mxu0
        %v581 = vadd.f32 %v372, %v580
        %582 = vmatprep.mubr.f32.mxu0 0.0
        %583 = vmatmul.mubr.f32.gmra.mrb[0].mxu0 %v274
        %v584 = vpop.f32.mrb[0].mxu0
        %v585 = vadd.f32 %v368, %v584
        %v586 = vpop.f32.mrb[0].mxu0
        %v587 = vadd.f32 %v372, %v586
        %588 = vmatprep.mubr.f32.mxu0 0.0
        %589 = vmatmul.mubr.f32.gmra.mrb[0].mxu0 %v275
        %v590 = vpop.f32.mrb[0].mxu0
        %v591 = vadd.f32 %v368, %v590
        %v592 = vpop.f32.mrb[0].mxu0
        %v593 = vadd.f32 %v372, %v592
        %594 = vmatprep.mubr.f32.mxu0 0.0
        %595 = vmatmul.mubr.f32.gmra.mrb[0].mxu0 %v276
        %v596 = vpop.f32.mrb[0].mxu0
        %v597 = vadd.f32 %v368, %v596
        %v598 = vpop.f32.mrb[0].mxu0
        %v599 = vadd.f32 %v372, %v598
        %600 = vmatprep.mubr.f32.mxu0 0.0
        %601 = vmatmul.mubr.f32.gmra.mrb[0].mxu0 %v277
        %v602 = vpop.f32.mrb[0].mxu0
        %v603 = vadd.f32 %v368, %v602
        %v604 = vpop.f32.mrb[0].mxu0
        %v605 = vadd.f32 %v372, %v604
        %606 = vmatprep.mubr.f32.mxu0 0.0
        %607 = vmatmul.mubr.f32.gmra.mrb[0].mxu0 %v278
        %v608 = vpop.f32.mrb[0].mxu0
        %v609 = vadd.f32 %v368, %v608
        %v610 = vpop.f32.mrb[0].mxu0
        %v611 = vadd.f32 %v372, %v610
        %612 = vmatprep.mubr.f32.mxu0 0.0
        %613 = vmatmul.mubr.f32.gmra.mrb[0].mxu0 %v279
        %v614 = vpop.f32.mrb[0].mxu0
        %v615 = vadd.f32 %v368, %v614
        %v616 = vpop.f32.mrb[0].mxu0
        %v617 = vadd.f32 %v372, %v616
        %618 = vmatprep.mubr.f32.mxu0 0.0
        %619 = vmatmul.mubr.f32.gmra.mrb[0].mxu0 %v280
        %v620 = vpop.f32.mrb[0].mxu0
        %v621 = vadd.f32 %v368, %v620
        %v622 = vpop.f32.mrb[0].mxu0
        %v623 = vadd.f32 %v372, %v622
        %624 = vmatprep.mubr.f32.mxu0 0.0
        %625 = vmatmul.mubr.f32.gmra.mrb[0].mxu0 %v281
        %v626 = vpop.f32.mrb[0].mxu0
        %v627 = vadd.f32 %v368, %v626
        %v628 = vpop.f32.mrb[0].mxu0
        %v629 = vadd.f32 %v372, %v628
        %630 = vmatprep.mubr.f32.mxu0 0.0
        %631 = vmatmul.mubr.f32.gmra.mrb[0].mxu0 %v282
        %v632 = vpop.f32.mrb[0].mxu0
        %v633 = vadd.f32 %v368, %v632
        %v634 = vpop.f32.mrb[0].mxu0
        %v635 = vadd.f32 %v372, %v634
        %636 = vmatprep.mubr.f32.mxu0 0.0
        %637 = vmatmul.mubr.f32.gmra.mrb[0].mxu0 %v283
        %v638 = vpop.f32.mrb[0].mxu0
        %v639 = vadd.f32 %v368, %v638
        %v640 = vpop.f32.mrb[0].mxu0
        %v641 = vadd.f32 %v372, %v640
        %642 = vmatprep.mubr.f32.mxu0 0.0
        %643 = vmatmul.mubr.f32.gmra.mrb[0].mxu0 %v284
        %v644 = vpop.f32.mrb[0].mxu0
        %v645 = vadd.f32 %v368, %v644
        %v646 = vpop.f32.mrb[0].mxu0
        %v647 = vadd.f32 %v372, %v646
        %648 = vmatprep.mubr.f32.mxu0 0.0
        %649 = vmatmul.mubr.f32.gmra.mrb[0].mxu0 %v285
        %v650 = vpop.f32.mrb[0].mxu0
        %v651 = vadd.f32 %v368, %v650
        %v652 = vpop.f32.mrb[0].mxu0
        %v653 = vadd.f32 %v372, %v652
        %654 = vmatprep.mubr.f32.mxu0 0.0
        %655 = vmatmul.mubr.f32.gmra.mrb[0].mxu0 %v286
        %v656 = vpop.f32.mrb[0].mxu0
        %v657 = vadd.f32 %v368, %v656
        %v658 = vpop.f32.mrb[0].mxu0
        %v659 = vadd.f32 %v372, %v658
        %660 = vmatprep.mubr.f32.mxu0 0.0
        %661 = vmatmul.mubr.f32.gmra.mrb[0].mxu0 %v287
        %v662 = vpop.f32.mrb[0].mxu0
        %v663 = vadd.f32 %v368, %v662
        %v664 = vpop.f32.mrb[0].mxu0
        %v665 = vadd.f32 %v372, %v664
        %666 = vmatprep.mubr.f32.mxu0 0.0
        %667 = vmatmul.mubr.f32.gmra.mrb[0].mxu0 %v288
        %v668 = vpop.f32.mrb[0].mxu0
        %v669 = vadd.f32 %v368, %v668
        %v670 = vpop.f32.mrb[0].mxu0
        %v671 = vadd.f32 %v372, %v670
        %672 = vmatprep.mubr.f32.mxu0 0.0
        %673 = vmatmul.mubr.f32.gmra.mrb[0].mxu0 %v289
        %v674 = vpop.f32.mrb[0].mxu0
        %v675 = vadd.f32 %v368, %v674
        %v676 = vpop.f32.mrb[0].mxu0
        %v677 = vadd.f32 %v372, %v676
        %678 = vmatprep.mubr.f32.mxu0 0.0
        %679 = vmatmul.mubr.f32.gmra.mrb[0].mxu0 %v290
        %v680 = vpop.f32.mrb[0].mxu0
        %v681 = vadd.f32 %v368, %v680
        %v682 = vpop.f32.mrb[0].mxu0
        %v683 = vadd.f32 %v372, %v682
        %684 = vmatprep.mubr.f32.mxu0 0.0
        %685 = vmatmul.mubr.f32.gmra.mrb[0].mxu0 %v291
        %v686 = vpop.f32.mrb[0].mxu0
        %v687 = vadd.f32 %v368, %v686
        %v688 = vpop.f32.mrb[0].mxu0
        %v689 = vadd.f32 %v372, %v688
        %690 = vmatprep.mubr.f32.mxu0 0.0
        %691 = vmatmul.mubr.f32.gmra.mrb[0].mxu0 %v292
        %v692 = vpop.f32.mrb[0].mxu0
        %v693 = vadd.f32 %v368, %v692
        %v694 = vpop.f32.mrb[0].mxu0
        %v695 = vadd.f32 %v372, %v694
        %696 = vmatprep.mubr.f32.mxu0 0.0
        %697 = vmatmul.mubr.f32.gmra.mrb[0].mxu0 %v293
        %v698 = vpop.f32.mrb[0].mxu0
        %v699 = vadd.f32 %v368, %v698
        %v700 = vpop.f32.mrb[0].mxu0
        %v701 = vadd.f32 %v372, %v700
        %702 = vmatprep.mubr.f32.mxu0 0.0
        %703 = vmatmul.mubr.f32.gmra.mrb[0].mxu0 %v294
        %v704 = vpop.f32.mrb[0].mxu0
        %v705 = vadd.f32 %v368, %v704
        %v706 = vpop.f32.mrb[0].mxu0
        %v707 = vadd.f32 %v372, %v706
        %708 = vmatprep.mubr.f32.mxu0 0.0
        %709 = vmatmul.mubr.f32.gmra.mrb[0].mxu0 %v295
        %v710 = vpop.f32.mrb[0].mxu0
        %v711 = vadd.f32 %v368, %v710
        %v712 = vpop.f32.mrb[0].mxu0
        %v713 = vadd.f32 %v372, %v712
        %714 = vmatprep.mubr.f32.mxu0 0.0
        %715 = vmatmul.mubr.f32.gmra.mrb[0].mxu0 %v296
        %v716 = vpop.f32.mrb[0].mxu0
        %v717 = vadd.f32 %v368, %v716
        %v718 = vpop.f32.mrb[0].mxu0
        %v719 = vadd.f32 %v372, %v718
        %720 = vmatprep.mubr.f32.mxu0 0.0
        %721 = vmatmul.mubr.f32.gmra.mrb[0].mxu0 %v297
        %v722 = vpop.f32.mrb[0].mxu0
        %v723 = vadd.f32 %v368, %v722
        %v724 = vpop.f32.mrb[0].mxu0
        %v725 = vadd.f32 %v372, %v724
        %726 = vmatprep.mubr.f32.mxu0 0.0
        %727 = vmatmul.mubr.f32.gmra.mrb[0].mxu0 %v298
        %v728 = vpop.f32.mrb[0].mxu0
        %v729 = vadd.f32 %v368, %v728
        %v730 = vpop.f32.mrb[0].mxu0
        %v731 = vadd.f32 %v372, %v730
        %732 = vmatprep.mubr.f32.mxu0 0.0
        %733 = vmatmul.mubr.f32.gmra.mrb[0].mxu0 %v299
        %v734 = vpop.f32.mrb[0].mxu0
        %v735 = vadd.f32 %v368, %v734
        %v736 = vpop.f32.mrb[0].mxu0
        %v737 = vadd.f32 %v372, %v736
        %738 = vmatprep.mubr.f32.mxu0 0.0
        %739 = vmatmul.mubr.f32.gmra.mrb[0].mxu0 %v300
        %v740 = vpop.f32.mrb[0].mxu0
        %v741 = vadd.f32 %v368, %v740
        %v742 = vpop.f32.mrb[0].mxu0
        %v743 = vadd.f32 %v372, %v742
        %744 = vmatprep.mubr.f32.mxu0 0.0
        %745 = vmatmul.mubr.f32.gmra.mrb[0].mxu0 %v301
        %v746 = vpop.f32.mrb[0].mxu0
        %v747 = vadd.f32 %v368, %v746
        %v748 = vpop.f32.mrb[0].mxu0
        %v749 = vadd.f32 %v372, %v748
        %750 = vmatprep.mubr.f32.mxu0 0.0
        %751 = vmatmul.mubr.f32.gmra.mrb[0].mxu0 %v302
        %v752 = vpop.f32.mrb[0].mxu0
        %v753 = vadd.f32 %v368, %v752
        %v754 = vpop.f32.mrb[0].mxu0
        %v755 = vadd.f32 %v372, %v754
        %756 = vmatprep.mubr.f32.mxu0 0.0
        %757 = vmatmul.mubr.f32.gmra.mrb[0].mxu0 %v303
        %v758 = vpop.f32.mrb[0].mxu0
        %v759 = vadd.f32 %v368, %v758
        %v760 = vpop.f32.mrb[0].mxu0
        %v761 = vadd.f32 %v372, %v760
        %762 = vmatprep.mubr.f32.mxu0 0.0
        %763 = vmatmul.mubr.f32.gmra.mrb[0].mxu0 %v304
        %v764 = vpop.f32.mrb[0].mxu0
        %v765 = vadd.f32 %v368, %v764
        %v766 = vpop.f32.mrb[0].mxu0
        %v767 = vadd.f32 %v372, %v766
        %768 = vmatprep.mubr.f32.mxu0 0.0
        %769 = vmatmul.mubr.f32.gmra.mrb[0].mxu0 %v305
        %v770 = vpop.f32.mrb[0].mxu0
        %v771 = vadd.f32 %v368, %v770
        %v772 = vpop.f32.mrb[0].mxu0
        %v773 = vadd.f32 %v372, %v772
        %774 = vmatprep.mubr.f32.mxu0 0.0
        %775 = vmatmul.mubr.f32.gmra.mrb[0].mxu0 %v306
        %v776 = vpop.f32.mrb[0].mxu0
        %v777 = vadd.f32 %v368, %v776
        %v778 = vpop.f32.mrb[0].mxu0
        %v779 = vadd.f32 %v372, %v778
        %780 = vmatprep.mubr.f32.mxu0 0.0
        %781 = vmatmul.mubr.f32.gmra.mrb[0].mxu0 %v307
        %v782 = vpop.f32.mrb[0].mxu0
        %v783 = vadd.f32 %v368, %v782
        %v784 = vpop.f32.mrb[0].mxu0
        %v785 = vadd.f32 %v372, %v784
        %786 = vmatprep.mubr.f32.mxu0 0.0
        %787 = vmatmul.mubr.f32.gmra.mrb[0].mxu0 %v308
        %v788 = vpop.f32.mrb[0].mxu0
        %v789 = vadd.f32 %v368, %v788
        %v790 = vpop.f32.mrb[0].mxu0
        %v791 = vadd.f32 %v372, %v790
        %792 = vmatprep.mubr.f32.mxu0 0.0
        %793 = vmatmul.mubr.f32.gmra.mrb[0].mxu0 %v309
        %v794 = vpop.f32.mrb[0].mxu0
        %v795 = vadd.f32 %v368, %v794
        %v796 = vpop.f32.mrb[0].mxu0
        %v797 = vadd.f32 %v372, %v796
        %798 = vmatprep.mubr.f32.mxu0 0.0
        %799 = vmatmul.mubr.f32.gmra.mrb[0].mxu0 %v310
        %v800 = vpop.f32.mrb[0].mxu0
        %v801 = vadd.f32 %v368, %v800
        %v802 = vpop.f32.mrb[0].mxu0
        %v803 = vadd.f32 %v372, %v802
        %804 = vmatprep.mubr.f32.mxu0 0.0
        %805 = vmatmul.mubr.f32.gmra.mrb[0].mxu0 %v311
        %v806 = vpop.f32.mrb[0].mxu0
        %v807 = vadd.f32 %v368, %v806
        %v808 = vpop.f32.mrb[0].mxu0
        %v809 = vadd.f32 %v372, %v808
        %810 = vmatprep.mubr.f32.mxu0 0.0
        %811 = vmatmul.mubr.f32.gmra.mrb[0].mxu0 %v312
        %v812 = vpop.f32.mrb[0].mxu0
        %v813 = vadd.f32 %v368, %v812
        %v814 = vpop.f32.mrb[0].mxu0
        %v815 = vadd.f32 %v372, %v814
        %816 = vmatprep.mubr.f32.mxu0 0.0
        %817 = vmatmul.mubr.f32.gmra.mrb[0].mxu0 %v313
        %v818 = vpop.f32.mrb[0].mxu0
        %v819 = vadd.f32 %v368, %v818
        %v820 = vpop.f32.mrb[0].mxu0
        %v821 = vadd.f32 %v372, %v820
        %822 = vmatprep.mubr.f32.mxu0 0.0
        %823 = vmatmul.mubr.f32.gmra.mrb[0].mxu0 %v314
        %v824 = vpop.f32.mrb[0].mxu0
        %v825 = vadd.f32 %v368, %v824
        %v826 = vpop.f32.mrb[0].mxu0
        %v827 = vadd.f32 %v372, %v826
        %828 = vdwg.mxu0
        %829 = vmatprep.subr.mxu0 0.0
        %830 = vmatpush1.msra.mxu0 %v317
        %831 = vmatprep.subr.mxu0 0.0
        %832 = vmatpush1.msra.mxu0 %v320
        %833 = vmatprep.subr.mxu0 0.0
        %834 = vmatpush1.msra.mxu0 %v323
        %835 = vmatprep.subr.mxu0 0.0
        %836 = vmatpush1.msra.mxu0 %v326
        %837 = vmatprep.subr.mxu0 0.0
        %838 = vmatpush1.msra.mxu0 %v329
        %839 = vmatprep.subr.mxu0 0.0
        %840 = vmatpush1.msra.mxu0 %v332
        %841 = vmatprep.subr.mxu0 0.0
        %842 = vmatpush1.msra.mxu0 %v335
        %843 = vmatprep.subr.mxu0 0.0
        %844 = vmatpush1.msra.mxu0 %v338
        %845 = vmatprep.subr.mxu0 0.0
        %846 = vmatpush1.msra.mxu0 %v341
        %847 = vmatprep.subr.mxu0 0.0
        %848 = vmatpush1.msra.mxu0 %v344
        %849 = vmatprep.subr.mxu0 0.0
        %850 = vmatpush1.msra.mxu0 %v347
        %851 = vmatprep.subr.mxu0 0.0
        %852 = vmatpush1.msra.mxu0 %v350
        %853 = vmatprep.subr.mxu0 0.0
        %854 = vmatpush1.msra.mxu0 %v353
        %855 = vmatprep.subr.mxu0 0.0
        %856 = vmatpush1.msra.mxu0 %v356
        %857 = vmatprep.subr.mxu0 0.0
        %858 = vmatpush1.msra.mxu0 %v359
        %859 = vmatprep.subr.mxu0 0.0
        %860 = vmatpush1.msra.mxu0 %v362
        %861 = vmatprep.subr.mxu0 0.0
        %862 = vmatpush1.msra.mxu0 0.0
        %863 = vmatprep.subr.mxu0 0.0
        %864 = vmatpush1.msra.mxu0 0.0
        %865 = vmatprep.subr.mxu0 0.0
        %866 = vmatpush1.msra.mxu0 0.0
        %867 = vmatprep.subr.mxu0 0.0
        %868 = vmatpush1.msra.mxu0 0.0
        %869 = vmatprep.subr.mxu0 0.0
        %870 = vmatpush1.msra.mxu0 0.0
        %871 = vmatprep.subr.mxu0 0.0
        %872 = vmatpush1.msra.mxu0 0.0
        %873 = vmatprep.subr.mxu0 0.0
        %874 = vmatpush1.msra.mxu0 0.0
        %875 = vmatprep.subr.mxu0 0.0
        %876 = vmatpush1.msra.mxu0 0.0
        %877 = vmatprep.subr.mxu0 0.0
        %878 = vmatpush1.msra.mxu0 0.0
        %879 = vmatprep.subr.mxu0 0.0
        %880 = vmatpush1.msra.mxu0 0.0
        %881 = vmatprep.subr.mxu0 0.0
        %882 = vmatpush1.msra.mxu0 0.0
        %883 = vmatprep.subr.mxu0 0.0
        %884 = vmatpush1.msra.mxu0 0.0
        %885 = vmatprep.subr.mxu0 0.0
        %886 = vmatpush1.msra.mxu0 0.0
        %887 = vmatprep.subr.mxu0 0.0
        %888 = vmatpush1.msra.mxu0 0.0
        %889 = vmatprep.subr.mxu0 0.0
        %890 = vmatpush1.msra.mxu0 0.0
        %891 = vmatprep.subr.mxu0 0.0
        %892 = vmatpush1.msra.mxu0 0.0
        %893 = vmatprep.mubr.f32.mxu0 0.0
        %894 = vmatmul.mubr.f32.gmra.mrb[0].mxu0 %v251
        %v895 = vpop.f32.mrb[0].mxu0
        %v896 = vadd.f32 %v376, %v895
        %v897 = vpop.f32.mrb[0].mxu0
        %898 = vmatprep.mubr.f32.mxu0 0.0
        %899 = vmatmul.mubr.f32.gmra.mrb[0].mxu0 %v252
        %v900 = vpop.f32.mrb[0].mxu0
        %v901 = vadd.f32 %v376, %v900
        %v902 = vpop.f32.mrb[0].mxu0
        %903 = vmatprep.mubr.f32.mxu0 0.0
        %904 = vmatmul.mubr.f32.gmra.mrb[0].mxu0 %v253
        %v905 = vpop.f32.mrb[0].mxu0
        %v906 = vadd.f32 %v376, %v905
        %v907 = vpop.f32.mrb[0].mxu0
        %908 = vmatprep.mubr.f32.mxu0 0.0
        %909 = vmatmul.mubr.f32.gmra.mrb[0].mxu0 %v254
        %v910 = vpop.f32.mrb[0].mxu0
        %v911 = vadd.f32 %v376, %v910
        %v912 = vpop.f32.mrb[0].mxu0
        %913 = vmatprep.mubr.f32.mxu0 0.0
        %914 = vmatmul.mubr.f32.gmra.mrb[0].mxu0 %v255
        %v915 = vpop.f32.mrb[0].mxu0
        %v916 = vadd.f32 %v376, %v915
        %v917 = vpop.f32.mrb[0].mxu0
        %918 = vmatprep.mubr.f32.mxu0 0.0
        %919 = vmatmul.mubr.f32.gmra.mrb[0].mxu0 %v256
        %v920 = vpop.f32.mrb[0].mxu0
        %v921 = vadd.f32 %v376, %v920
        %v922 = vpop.f32.mrb[0].mxu0
        %923 = vmatprep.mubr.f32.mxu0 0.0
        %924 = vmatmul.mubr.f32.gmra.mrb[0].mxu0 %v257
        %v925 = vpop.f32.mrb[0].mxu0
        %v926 = vadd.f32 %v376, %v925
        %v927 = vpop.f32.mrb[0].mxu0
        %928 = vmatprep.mubr.f32.mxu0 0.0
        %929 = vmatmul.mubr.f32.gmra.mrb[0].mxu0 %v258
        %v930 = vpop.f32.mrb[0].mxu0
        %v931 = vadd.f32 %v376, %v930
        %v932 = vpop.f32.mrb[0].mxu0
        %933 = vmatprep.mubr.f32.mxu0 0.0
        %934 = vmatmul.mubr.f32.gmra.mrb[0].mxu0 %v259
        %v935 = vpop.f32.mrb[0].mxu0
        %v936 = vadd.f32 %v376, %v935
        %v937 = vpop.f32.mrb[0].mxu0
        %938 = vmatprep.mubr.f32.mxu0 0.0
        %939 = vmatmul.mubr.f32.gmra.mrb[0].mxu0 %v260
        %v940 = vpop.f32.mrb[0].mxu0
        %v941 = vadd.f32 %v376, %v940
        %v942 = vpop.f32.mrb[0].mxu0
        %943 = vmatprep.mubr.f32.mxu0 0.0
        %944 = vmatmul.mubr.f32.gmra.mrb[0].mxu0 %v261
        %v945 = vpop.f32.mrb[0].mxu0
        %v946 = vadd.f32 %v376, %v945
        %v947 = vpop.f32.mrb[0].mxu0
        %948 = vmatprep.mubr.f32.mxu0 0.0
        %949 = vmatmul.mubr.f32.gmra.mrb[0].mxu0 %v262
        %v950 = vpop.f32.mrb[0].mxu0
        %v951 = vadd.f32 %v376, %v950
        %v952 = vpop.f32.mrb[0].mxu0
        %953 = vmatprep.mubr.f32.mxu0 0.0
        %954 = vmatmul.mubr.f32.gmra.mrb[0].mxu0 %v263
        %v955 = vpop.f32.mrb[0].mxu0
        %v956 = vadd.f32 %v376, %v955
        %v957 = vpop.f32.mrb[0].mxu0
        %958 = vmatprep.mubr.f32.mxu0 0.0
        %959 = vmatmul.mubr.f32.gmra.mrb[0].mxu0 %v264
        %v960 = vpop.f32.mrb[0].mxu0
        %v961 = vadd.f32 %v376, %v960
        %v962 = vpop.f32.mrb[0].mxu0
        %963 = vmatprep.mubr.f32.mxu0 0.0
        %964 = vmatmul.mubr.f32.gmra.mrb[0].mxu0 %v265
        %v965 = vpop.f32.mrb[0].mxu0
        %v966 = vadd.f32 %v376, %v965
        %v967 = vpop.f32.mrb[0].mxu0
        %968 = vmatprep.mubr.f32.mxu0 0.0
        %969 = vmatmul.mubr.f32.gmra.mrb[0].mxu0 %v266
        %v970 = vpop.f32.mrb[0].mxu0
        %v971 = vadd.f32 %v376, %v970
        %v972 = vpop.f32.mrb[0].mxu0
        %973 = vmatprep.mubr.f32.mxu0 0.0
        %974 = vmatmul.mubr.f32.gmra.mrb[0].mxu0 %v267
        %v975 = vpop.f32.mrb[0].mxu0
        %v976 = vadd.f32 %v376, %v975
        %v977 = vpop.f32.mrb[0].mxu0
        %978 = vmatprep.mubr.f32.mxu0 0.0
        %979 = vmatmul.mubr.f32.gmra.mrb[0].mxu0 %v268
        %v980 = vpop.f32.mrb[0].mxu0
        %v981 = vadd.f32 %v376, %v980
        %v982 = vpop.f32.mrb[0].mxu0
        %983 = vmatprep.mubr.f32.mxu0 0.0
        %984 = vmatmul.mubr.f32.gmra.mrb[0].mxu0 %v269
        %v985 = vpop.f32.mrb[0].mxu0
        %v986 = vadd.f32 %v376, %v985
        %v987 = vpop.f32.mrb[0].mxu0
        %988 = vmatprep.mubr.f32.mxu0 0.0
        %989 = vmatmul.mubr.f32.gmra.mrb[0].mxu0 %v270
        %v990 = vpop.f32.mrb[0].mxu0
        %v991 = vadd.f32 %v376, %v990
        %v992 = vpop.f32.mrb[0].mxu0
        %993 = vmatprep.mubr.f32.mxu0 0.0
        %994 = vmatmul.mubr.f32.gmra.mrb[0].mxu0 %v271
        %v995 = vpop.f32.mrb[0].mxu0
        %v996 = vadd.f32 %v376, %v995
        %v997 = vpop.f32.mrb[0].mxu0
        %998 = vmatprep.mubr.f32.mxu0 0.0
        %999 = vmatmul.mubr.f32.gmra.mrb[0].mxu0 %v272
        %v1000 = vpop.f32.mrb[0].mxu0
        %v1001 = vadd.f32 %v376, %v1000
        %v1002 = vpop.f32.mrb[0].mxu0
        %1003 = vmatprep.mubr.f32.mxu0 0.0
        %1004 = vmatmul.mubr.f32.gmra.mrb[0].mxu0 %v273
        %v1005 = vpop.f32.mrb[0].mxu0
        %v1006 = vadd.f32 %v376, %v1005
        %v1007 = vpop.f32.mrb[0].mxu0
        %1008 = vmatprep.mubr.f32.mxu0 0.0
        %1009 = vmatmul.mubr.f32.gmra.mrb[0].mxu0 %v274
        %v1010 = vpop.f32.mrb[0].mxu0
        %v1011 = vadd.f32 %v376, %v1010
        %v1012 = vpop.f32.mrb[0].mxu0
        %1013 = vmatprep.mubr.f32.mxu0 0.0
        %1014 = vmatmul.mubr.f32.gmra.mrb[0].mxu0 %v275
        %v1015 = vpop.f32.mrb[0].mxu0
        %v1016 = vadd.f32 %v376, %v1015
        %v1017 = vpop.f32.mrb[0].mxu0
        %1018 = vmatprep.mubr.f32.mxu0 0.0
        %1019 = vmatmul.mubr.f32.gmra.mrb[0].mxu0 %v276
        %v1020 = vpop.f32.mrb[0].mxu0
        %v1021 = vadd.f32 %v376, %v1020
        %v1022 = vpop.f32.mrb[0].mxu0
        %1023 = vmatprep.mubr.f32.mxu0 0.0
        %1024 = vmatmul.mubr.f32.gmra.mrb[0].mxu0 %v277
        %v1025 = vpop.f32.mrb[0].mxu0
        %v1026 = vadd.f32 %v376, %v1025
        %v1027 = vpop.f32.mrb[0].mxu0
        %1028 = vmatprep.mubr.f32.mxu0 0.0
        %1029 = vmatmul.mubr.f32.gmra.mrb[0].mxu0 %v278
        %v1030 = vpop.f32.mrb[0].mxu0
        %v1031 = vadd.f32 %v376, %v1030
        %v1032 = vpop.f32.mrb[0].mxu0
        %1033 = vmatprep.mubr.f32.mxu0 0.0
        %1034 = vmatmul.mubr.f32.gmra.mrb[0].mxu0 %v279
        %v1035 = vpop.f32.mrb[0].mxu0
        %v1036 = vadd.f32 %v376, %v1035
        %v1037 = vpop.f32.mrb[0].mxu0
        %1038 = vmatprep.mubr.f32.mxu0 0.0
        %1039 = vmatmul.mubr.f32.gmra.mrb[0].mxu0 %v280
        %v1040 = vpop.f32.mrb[0].mxu0
        %v1041 = vadd.f32 %v376, %v1040
        %v1042 = vpop.f32.mrb[0].mxu0
        %1043 = vmatprep.mubr.f32.mxu0 0.0
        %1044 = vmatmul.mubr.f32.gmra.mrb[0].mxu0 %v281
        %v1045 = vpop.f32.mrb[0].mxu0
        %v1046 = vadd.f32 %v376, %v1045
        %v1047 = vpop.f32.mrb[0].mxu0
        %1048 = vmatprep.mubr.f32.mxu0 0.0
        %1049 = vmatmul.mubr.f32.gmra.mrb[0].mxu0 %v282
        %v1050 = vpop.f32.mrb[0].mxu0
        %v1051 = vadd.f32 %v376, %v1050
        %v1052 = vpop.f32.mrb[0].mxu0
        %1053 = vmatprep.mubr.f32.mxu0 0.0
        %1054 = vmatmul.mubr.f32.gmra.mrb[0].mxu0 %v283
        %v1055 = vpop.f32.mrb[0].mxu0
        %v1056 = vadd.f32 %v376, %v1055
        %v1057 = vpop.f32.mrb[0].mxu0
        %1058 = vmatprep.mubr.f32.mxu0 0.0
        %1059 = vmatmul.mubr.f32.gmra.mrb[0].mxu0 %v284
        %v1060 = vpop.f32.mrb[0].mxu0
        %v1061 = vadd.f32 %v376, %v1060
        %v1062 = vpop.f32.mrb[0].mxu0
        %1063 = vmatprep.mubr.f32.mxu0 0.0
        %1064 = vmatmul.mubr.f32.gmra.mrb[0].mxu0 %v285
        %v1065 = vpop.f32.mrb[0].mxu0
        %v1066 = vadd.f32 %v376, %v1065
        %v1067 = vpop.f32.mrb[0].mxu0
        %1068 = vmatprep.mubr.f32.mxu0 0.0
        %1069 = vmatmul.mubr.f32.gmra.mrb[0].mxu0 %v286
        %v1070 = vpop.f32.mrb[0].mxu0
        %v1071 = vadd.f32 %v376, %v1070
        %v1072 = vpop.f32.mrb[0].mxu0
        %1073 = vmatprep.mubr.f32.mxu0 0.0
        %1074 = vmatmul.mubr.f32.gmra.mrb[0].mxu0 %v287
        %v1075 = vpop.f32.mrb[0].mxu0
        %v1076 = vadd.f32 %v376, %v1075
        %v1077 = vpop.f32.mrb[0].mxu0
        %1078 = vmatprep.mubr.f32.mxu0 0.0
        %1079 = vmatmul.mubr.f32.gmra.mrb[0].mxu0 %v288
        %v1080 = vpop.f32.mrb[0].mxu0
        %v1081 = vadd.f32 %v376, %v1080
        %v1082 = vpop.f32.mrb[0].mxu0
        %1083 = vmatprep.mubr.f32.mxu0 0.0
        %1084 = vmatmul.mubr.f32.gmra.mrb[0].mxu0 %v289
        %v1085 = vpop.f32.mrb[0].mxu0
        %v1086 = vadd.f32 %v376, %v1085
        %v1087 = vpop.f32.mrb[0].mxu0
        %1088 = vmatprep.mubr.f32.mxu0 0.0
        %1089 = vmatmul.mubr.f32.gmra.mrb[0].mxu0 %v290
        %v1090 = vpop.f32.mrb[0].mxu0
        %v1091 = vadd.f32 %v376, %v1090
        %v1092 = vpop.f32.mrb[0].mxu0
        %1093 = vmatprep.mubr.f32.mxu0 0.0
        %1094 = vmatmul.mubr.f32.gmra.mrb[0].mxu0 %v291
        %v1095 = vpop.f32.mrb[0].mxu0
        %v1096 = vadd.f32 %v376, %v1095
        %v1097 = vpop.f32.mrb[0].mxu0
        %1098 = vmatprep.mubr.f32.mxu0 0.0
        %1099 = vmatmul.mubr.f32.gmra.mrb[0].mxu0 %v292
        %v1100 = vpop.f32.mrb[0].mxu0
        %v1101 = vadd.f32 %v376, %v1100
        %v1102 = vpop.f32.mrb[0].mxu0
        %1103 = vmatprep.mubr.f32.mxu0 0.0
        %1104 = vmatmul.mubr.f32.gmra.mrb[0].mxu0 %v293
        %v1105 = vpop.f32.mrb[0].mxu0
        %v1106 = vadd.f32 %v376, %v1105
        %v1107 = vpop.f32.mrb[0].mxu0
        %1108 = vmatprep.mubr.f32.mxu0 0.0
        %1109 = vmatmul.mubr.f32.gmra.mrb[0].mxu0 %v294
        %v1110 = vpop.f32.mrb[0].mxu0
        %v1111 = vadd.f32 %v376, %v1110
        %v1112 = vpop.f32.mrb[0].mxu0
        %1113 = vmatprep.mubr.f32.mxu0 0.0
        %1114 = vmatmul.mubr.f32.gmra.mrb[0].mxu0 %v295
        %v1115 = vpop.f32.mrb[0].mxu0
        %v1116 = vadd.f32 %v376, %v1115
        %v1117 = vpop.f32.mrb[0].mxu0
        %1118 = vmatprep.mubr.f32.mxu0 0.0
        %1119 = vmatmul.mubr.f32.gmra.mrb[0].mxu0 %v296
        %v1120 = vpop.f32.mrb[0].mxu0
        %v1121 = vadd.f32 %v376, %v1120
        %v1122 = vpop.f32.mrb[0].mxu0
        %1123 = vmatprep.mubr.f32.mxu0 0.0
        %1124 = vmatmul.mubr.f32.gmra.mrb[0].mxu0 %v297
        %v1125 = vpop.f32.mrb[0].mxu0
        %v1126 = vadd.f32 %v376, %v1125
        %v1127 = vpop.f32.mrb[0].mxu0
        %1128 = vmatprep.mubr.f32.mxu0 0.0
        %1129 = vmatmul.mubr.f32.gmra.mrb[0].mxu0 %v298
        %v1130 = vpop.f32.mrb[0].mxu0
        %v1131 = vadd.f32 %v376, %v1130
        %v1132 = vpop.f32.mrb[0].mxu0
        %1133 = vmatprep.mubr.f32.mxu0 0.0
        %1134 = vmatmul.mubr.f32.gmra.mrb[0].mxu0 %v299
        %v1135 = vpop.f32.mrb[0].mxu0
        %v1136 = vadd.f32 %v376, %v1135
        %v1137 = vpop.f32.mrb[0].mxu0
        %1138 = vmatprep.mubr.f32.mxu0 0.0
        %1139 = vmatmul.mubr.f32.gmra.mrb[0].mxu0 %v300
        %v1140 = vpop.f32.mrb[0].mxu0
        %v1141 = vadd.f32 %v376, %v1140
        %v1142 = vpop.f32.mrb[0].mxu0
        %1143 = vmatprep.mubr.f32.mxu0 0.0
        %1144 = vmatmul.mubr.f32.gmra.mrb[0].mxu0 %v301
        %v1145 = vpop.f32.mrb[0].mxu0
        %v1146 = vadd.f32 %v376, %v1145
        %v1147 = vpop.f32.mrb[0].mxu0
        %1148 = vmatprep.mubr.f32.mxu0 0.0
        %1149 = vmatmul.mubr.f32.gmra.mrb[0].mxu0 %v302
        %v1150 = vpop.f32.mrb[0].mxu0
        %v1151 = vadd.f32 %v376, %v1150
        %v1152 = vpop.f32.mrb[0].mxu0
        %1153 = vmatprep.mubr.f32.mxu0 0.0
        %1154 = vmatmul.mubr.f32.gmra.mrb[0].mxu0 %v303
        %v1155 = vpop.f32.mrb[0].mxu0
        %v1156 = vadd.f32 %v376, %v1155
        %v1157 = vpop.f32.mrb[0].mxu0
        %1158 = vmatprep.mubr.f32.mxu0 0.0
        %1159 = vmatmul.mubr.f32.gmra.mrb[0].mxu0 %v304
        %v1160 = vpop.f32.mrb[0].mxu0
        %v1161 = vadd.f32 %v376, %v1160
        %v1162 = vpop.f32.mrb[0].mxu0
        %1163 = vmatprep.mubr.f32.mxu0 0.0
        %1164 = vmatmul.mubr.f32.gmra.mrb[0].mxu0 %v305
        %v1165 = vpop.f32.mrb[0].mxu0
        %v1166 = vadd.f32 %v376, %v1165
        %v1167 = vpop.f32.mrb[0].mxu0
        %1168 = vmatprep.mubr.f32.mxu0 0.0
        %1169 = vmatmul.mubr.f32.gmra.mrb[0].mxu0 %v306
        %v1170 = vpop.f32.mrb[0].mxu0
        %v1171 = vadd.f32 %v376, %v1170
        %v1172 = vpop.f32.mrb[0].mxu0
        %1173 = vmatprep.mubr.f32.mxu0 0.0
        %1174 = vmatmul.mubr.f32.gmra.mrb[0].mxu0 %v307
        %v1175 = vpop.f32.mrb[0].mxu0
        %v1176 = vadd.f32 %v376, %v1175
        %v1177 = vpop.f32.mrb[0].mxu0
        %1178 = vmatprep.mubr.f32.mxu0 0.0
        %1179 = vmatmul.mubr.f32.gmra.mrb[0].mxu0 %v308
        %v1180 = vpop.f32.mrb[0].mxu0
        %v1181 = vadd.f32 %v376, %v1180
        %v1182 = vpop.f32.mrb[0].mxu0
        %1183 = vmatprep.mubr.f32.mxu0 0.0
        %1184 = vmatmul.mubr.f32.gmra.mrb[0].mxu0 %v309
        %v1185 = vpop.f32.mrb[0].mxu0
        %v1186 = vadd.f32 %v376, %v1185
        %v1187 = vpop.f32.mrb[0].mxu0
        %1188 = vmatprep.mubr.f32.mxu0 0.0
        %1189 = vmatmul.mubr.f32.gmra.mrb[0].mxu0 %v310
        %v1190 = vpop.f32.mrb[0].mxu0
        %v1191 = vadd.f32 %v376, %v1190
        %v1192 = vpop.f32.mrb[0].mxu0
        %1193 = vmatprep.mubr.f32.mxu0 0.0
        %1194 = vmatmul.mubr.f32.gmra.mrb[0].mxu0 %v311
        %v1195 = vpop.f32.mrb[0].mxu0
        %v1196 = vadd.f32 %v376, %v1195
        %v1197 = vpop.f32.mrb[0].mxu0
        %1198 = vmatprep.mubr.f32.mxu0 0.0
        %1199 = vmatmul.mubr.f32.gmra.mrb[0].mxu0 %v312
        %v1200 = vpop.f32.mrb[0].mxu0
        %v1201 = vadd.f32 %v376, %v1200
        %v1202 = vpop.f32.mrb[0].mxu0
        %1203 = vmatprep.mubr.f32.mxu0 0.0
        %1204 = vmatmul.mubr.f32.gmra.mrb[0].mxu0 %v313
        %v1205 = vpop.f32.mrb[0].mxu0
        %v1206 = vadd.f32 %v376, %v1205
        %v1207 = vpop.f32.mrb[0].mxu0
        %1208 = vmatprep.mubr.f32.mxu0 0.0
        %1209 = vmatmul.mubr.f32.gmra.mrb[0].mxu0 %v314
        %v1210 = vpop.f32.mrb[0].mxu0
        %v1211 = vadd.f32 %v376, %v1210
        %v1212 = vpop.f32.mrb[0].mxu0
        %1213 = vdwg.mxu0
        %1214 = vst [vmem:[%s245] sm:$0xff] %v447
        %1215 = vst [vmem:[%s245 + $0x8] sm:$0xff] %v449
        %1216 = vst [vmem:[%s245 + $0x10] sm:$0xff] %v896
        %1217 = vst [vmem:[%s245 + $0x18] sm:$0xff] %v453
        %1218 = vst [vmem:[%s245 + $0x20] sm:$0xff] %v455
        %1219 = vst [vmem:[%s245 + $0x28] sm:$0xff] %v901
        %1220 = vst [vmem:[%s245 + $0x30] sm:$0xff] %v459
        %1221 = vst [vmem:[%s245 + $0x38] sm:$0xff] %v461
        %1222 = vst [vmem:[%s245 + $0x40] sm:$0xff] %v906
        %1223 = vst [vmem:[%s245 + $0x48] sm:$0xff] %v465
        %1224 = vst [vmem:[%s245 + $0x50] sm:$0xff] %v467
        %1225 = vst [vmem:[%s245 + $0x58] sm:$0xff] %v911
        %1226 = vst [vmem:[%s245 + $0x60] sm:$0xff] %v471
        %1227 = vst [vmem:[%s245 + $0x68] sm:$0xff] %v473
        %1228 = vst [vmem:[%s245 + $0x70] sm:$0xff] %v916
        %1229 = vst [vmem:[%s245 + $0x78] sm:$0xff] %v477
        %1230 = vst [vmem:[%s245 + $0x80] sm:$0xff] %v479
        %1231 = vst [vmem:[%s245 + $0x88] sm:$0xff] %v921
        %1232 = vst [vmem:[%s245 + $0x90] sm:$0xff] %v483
        %1233 = vst [vmem:[%s245 + $0x98] sm:$0xff] %v485
        %1234 = vst [vmem:[%s245 + $0xa0] sm:$0xff] %v926
        %1235 = vst [vmem:[%s245 + $0xa8] sm:$0xff] %v489
        %1236 = vst [vmem:[%s245 + $0xb0] sm:$0xff] %v491
        %1237 = vst [vmem:[%s245 + $0xb8] sm:$0xff] %v931
        %1238 = vst [vmem:[%s245 + $0xc0] sm:$0xff] %v495
        %1239 = vst [vmem:[%s245 + $0xc8] sm:$0xff] %v497
        %1240 = vst [vmem:[%s245 + $0xd0] sm:$0xff] %v936
        %1241 = vst [vmem:[%s245 + $0xd8] sm:$0xff] %v501
        %1242 = vst [vmem:[%s245 + $0xe0] sm:$0xff] %v503
        %1243 = vst [vmem:[%s245 + $0xe8] sm:$0xff] %v941
        %1244 = vst [vmem:[%s245 + $0xf0] sm:$0xff] %v507
        %1245 = vst [vmem:[%s245 + $0xf8] sm:$0xff] %v509
        %1246 = vst [vmem:[%s245 + $0x100] sm:$0xff] %v946
        %1247 = vst [vmem:[%s245 + $0x108] sm:$0xff] %v513
        %1248 = vst [vmem:[%s245 + $0x110] sm:$0xff] %v515
        %1249 = vst [vmem:[%s245 + $0x118] sm:$0xff] %v951
        %1250 = vst [vmem:[%s245 + $0x120] sm:$0xff] %v519
        %1251 = vst [vmem:[%s245 + $0x128] sm:$0xff] %v521
        %1252 = vst [vmem:[%s245 + $0x130] sm:$0xff] %v956
        %1253 = vst [vmem:[%s245 + $0x138] sm:$0xff] %v525
        %1254 = vst [vmem:[%s245 + $0x140] sm:$0xff] %v527
        %1255 = vst [vmem:[%s245 + $0x148] sm:$0xff] %v961
        %1256 = vst [vmem:[%s245 + $0x150] sm:$0xff] %v531
        %1257 = vst [vmem:[%s245 + $0x158] sm:$0xff] %v533
        %1258 = vst [vmem:[%s245 + $0x160] sm:$0xff] %v966
        %1259 = vst [vmem:[%s245 + $0x168] sm:$0xff] %v537
        %1260 = vst [vmem:[%s245 + $0x170] sm:$0xff] %v539
        %1261 = vst [vmem:[%s245 + $0x178] sm:$0xff] %v971
        %1262 = vst [vmem:[%s245 + $0x180] sm:$0xff] %v543
        %1263 = vst [vmem:[%s245 + $0x188] sm:$0xff] %v545
        %1264 = vst [vmem:[%s245 + $0x190] sm:$0xff] %v976
        %1265 = vst [vmem:[%s245 + $0x198] sm:$0xff] %v549
        %1266 = vst [vmem:[%s245 + $0x1a0] sm:$0xff] %v551
        %1267 = vst [vmem:[%s245 + $0x1a8] sm:$0xff] %v981
        %1268 = vst [vmem:[%s245 + $0x1b0] sm:$0xff] %v555
        %1269 = vst [vmem:[%s245 + $0x1b8] sm:$0xff] %v557
        %1270 = vst [vmem:[%s245 + $0x1c0] sm:$0xff] %v986
        %1271 = vst [vmem:[%s245 + $0x1c8] sm:$0xff] %v561
        %1272 = vst [vmem:[%s245 + $0x1d0] sm:$0xff] %v563
        %1273 = vst [vmem:[%s245 + $0x1d8] sm:$0xff] %v991
        %1274 = vst [vmem:[%s245 + $0x1e0] sm:$0xff] %v567
        %1275 = vst [vmem:[%s245 + $0x1e8] sm:$0xff] %v569
        %1276 = vst [vmem:[%s245 + $0x1f0] sm:$0xff] %v996
        %1277 = vst [vmem:[%s245 + $0x1f8] sm:$0xff] %v573
        %1278 = vst [vmem:[%s245 + $0x200] sm:$0xff] %v575
        %1279 = vst [vmem:[%s245 + $0x208] sm:$0xff] %v1001
        %1280 = vst [vmem:[%s245 + $0x210] sm:$0xff] %v579
        %1281 = vst [vmem:[%s245 + $0x218] sm:$0xff] %v581
        %1282 = vst [vmem:[%s245 + $0x220] sm:$0xff] %v1006
        %1283 = vst [vmem:[%s245 + $0x228] sm:$0xff] %v585
        %1284 = vst [vmem:[%s245 + $0x230] sm:$0xff] %v587
        %1285 = vst [vmem:[%s245 + $0x238] sm:$0xff] %v1011
        %1286 = vst [vmem:[%s245 + $0x240] sm:$0xff] %v591
        %1287 = vst [vmem:[%s245 + $0x248] sm:$0xff] %v593
        %1288 = vst [vmem:[%s245 + $0x250] sm:$0xff] %v1016
        %1289 = vst [vmem:[%s245 + $0x258] sm:$0xff] %v597
        %1290 = vst [vmem:[%s245 + $0x260] sm:$0xff] %v599
        %1291 = vst [vmem:[%s245 + $0x268] sm:$0xff] %v1021
        %1292 = vst [vmem:[%s245 + $0x270] sm:$0xff] %v603
        %1293 = vst [vmem:[%s245 + $0x278] sm:$0xff] %v605
        %1294 = vst [vmem:[%s245 + $0x280] sm:$0xff] %v1026
        %1295 = vst [vmem:[%s245 + $0x288] sm:$0xff] %v609
        %1296 = vst [vmem:[%s245 + $0x290] sm:$0xff] %v611
        %1297 = vst [vmem:[%s245 + $0x298] sm:$0xff] %v1031
        %1298 = vst [vmem:[%s245 + $0x2a0] sm:$0xff] %v615
        %1299 = vst [vmem:[%s245 + $0x2a8] sm:$0xff] %v617
        %1300 = vst [vmem:[%s245 + $0x2b0] sm:$0xff] %v1036
        %1301 = vst [vmem:[%s245 + $0x2b8] sm:$0xff] %v621
        %1302 = vst [vmem:[%s245 + $0x2c0] sm:$0xff] %v623
        %1303 = vst [vmem:[%s245 + $0x2c8] sm:$0xff] %v1041
        %1304 = vst [vmem:[%s245 + $0x2d0] sm:$0xff] %v627
        %1305 = vst [vmem:[%s245 + $0x2d8] sm:$0xff] %v629
        %1306 = vst [vmem:[%s245 + $0x2e0] sm:$0xff] %v1046
        %1307 = vst [vmem:[%s245 + $0x2e8] sm:$0xff] %v633
        %1308 = vst [vmem:[%s245 + $0x2f0] sm:$0xff] %v635
        %1309 = vst [vmem:[%s245 + $0x2f8] sm:$0xff] %v1051
        %1310 = vst [vmem:[%s245 + $0x300] sm:$0xff] %v639
        %1311 = vst [vmem:[%s245 + $0x308] sm:$0xff] %v641
        %1312 = vst [vmem:[%s245 + $0x310] sm:$0xff] %v1056
        %1313 = vst [vmem:[%s245 + $0x318] sm:$0xff] %v645
        %1314 = vst [vmem:[%s245 + $0x320] sm:$0xff] %v647
        %1315 = vst [vmem:[%s245 + $0x328] sm:$0xff] %v1061
        %1316 = vst [vmem:[%s245 + $0x330] sm:$0xff] %v651
        %1317 = vst [vmem:[%s245 + $0x338] sm:$0xff] %v653
        %1318 = vst [vmem:[%s245 + $0x340] sm:$0xff] %v1066
        %1319 = vst [vmem:[%s245 + $0x348] sm:$0xff] %v657
        %1320 = vst [vmem:[%s245 + $0x350] sm:$0xff] %v659
        %1321 = vst [vmem:[%s245 + $0x358] sm:$0xff] %v1071
        %1322 = vst [vmem:[%s245 + $0x360] sm:$0xff] %v663
        %1323 = vst [vmem:[%s245 + $0x368] sm:$0xff] %v665
        %1324 = vst [vmem:[%s245 + $0x370] sm:$0xff] %v1076
        %1325 = vst [vmem:[%s245 + $0x378] sm:$0xff] %v669
        %1326 = vst [vmem:[%s245 + $0x380] sm:$0xff] %v671
        %1327 = vst [vmem:[%s245 + $0x388] sm:$0xff] %v1081
        %1328 = vst [vmem:[%s245 + $0x390] sm:$0xff] %v675
        %1329 = vst [vmem:[%s245 + $0x398] sm:$0xff] %v677
        %1330 = vst [vmem:[%s245 + $0x3a0] sm:$0xff] %v1086
        %1331 = vst [vmem:[%s245 + $0x3a8] sm:$0xff] %v681
        %1332 = vst [vmem:[%s245 + $0x3b0] sm:$0xff] %v683
        %1333 = vst [vmem:[%s245 + $0x3b8] sm:$0xff] %v1091
        %1334 = vst [vmem:[%s245 + $0x3c0] sm:$0xff] %v687
        %1335 = vst [vmem:[%s245 + $0x3c8] sm:$0xff] %v689
        %1336 = vst [vmem:[%s245 + $0x3d0] sm:$0xff] %v1096
        %1337 = vst [vmem:[%s245 + $0x3d8] sm:$0xff] %v693
        %1338 = vst [vmem:[%s245 + $0x3e0] sm:$0xff] %v695
        %1339 = vst [vmem:[%s245 + $0x3e8] sm:$0xff] %v1101
        %1340 = vst [vmem:[%s245 + $0x3f0] sm:$0xff] %v699
        %1341 = vst [vmem:[%s245 + $0x3f8] sm:$0xff] %v701
        %1342 = vst [vmem:[%s245 + $0x400] sm:$0xff] %v1106
        %1343 = vst [vmem:[%s245 + $0x408] sm:$0xff] %v705
        %1344 = vst [vmem:[%s245 + $0x410] sm:$0xff] %v707
        %1345 = vst [vmem:[%s245 + $0x418] sm:$0xff] %v1111
        %1346 = vst [vmem:[%s245 + $0x420] sm:$0xff] %v711
        %1347 = vst [vmem:[%s245 + $0x428] sm:$0xff] %v713
        %1348 = vst [vmem:[%s245 + $0x430] sm:$0xff] %v1116
        %1349 = vst [vmem:[%s245 + $0x438] sm:$0xff] %v717
        %1350 = vst [vmem:[%s245 + $0x440] sm:$0xff] %v719
        %1351 = vst [vmem:[%s245 + $0x448] sm:$0xff] %v1121
        %1352 = vst [vmem:[%s245 + $0x450] sm:$0xff] %v723
        %1353 = vst [vmem:[%s245 + $0x458] sm:$0xff] %v725
        %1354 = vst [vmem:[%s245 + $0x460] sm:$0xff] %v1126
        %1355 = vst [vmem:[%s245 + $0x468] sm:$0xff] %v729
        %1356 = vst [vmem:[%s245 + $0x470] sm:$0xff] %v731
        %1357 = vst [vmem:[%s245 + $0x478] sm:$0xff] %v1131
        %1358 = vst [vmem:[%s245 + $0x480] sm:$0xff] %v735
        %1359 = vst [vmem:[%s245 + $0x488] sm:$0xff] %v737
        %1360 = vst [vmem:[%s245 + $0x490] sm:$0xff] %v1136
        %1361 = vst [vmem:[%s245 + $0x498] sm:$0xff] %v741
        %1362 = vst [vmem:[%s245 + $0x4a0] sm:$0xff] %v743
        %1363 = vst [vmem:[%s245 + $0x4a8] sm:$0xff] %v1141
        %1364 = vst [vmem:[%s245 + $0x4b0] sm:$0xff] %v747
        %1365 = vst [vmem:[%s245 + $0x4b8] sm:$0xff] %v749
        %1366 = vst [vmem:[%s245 + $0x4c0] sm:$0xff] %v1146
        %1367 = vst [vmem:[%s245 + $0x4c8] sm:$0xff] %v753
        %1368 = vst [vmem:[%s245 + $0x4d0] sm:$0xff] %v755
        %1369 = vst [vmem:[%s245 + $0x4d8] sm:$0xff] %v1151
        %1370 = vst [vmem:[%s245 + $0x4e0] sm:$0xff] %v759
        %1371 = vst [vmem:[%s245 + $0x4e8] sm:$0xff] %v761
        %1372 = vst [vmem:[%s245 + $0x4f0] sm:$0xff] %v1156
        %1373 = vst [vmem:[%s245 + $0x4f8] sm:$0xff] %v765
        %1374 = vst [vmem:[%s245 + $0x500] sm:$0xff] %v767
        %1375 = vst [vmem:[%s245 + $0x508] sm:$0xff] %v1161
        %1376 = vst [vmem:[%s245 + $0x510] sm:$0xff] %v771
        %1377 = vst [vmem:[%s245 + $0x518] sm:$0xff] %v773
        %1378 = vst [vmem:[%s245 + $0x520] sm:$0xff] %v1166
        %1379 = vst [vmem:[%s245 + $0x528] sm:$0xff] %v777
        %1380 = vst [vmem:[%s245 + $0x530] sm:$0xff] %v779
        %1381 = vst [vmem:[%s245 + $0x538] sm:$0xff] %v1171
        %1382 = vst [vmem:[%s245 + $0x540] sm:$0xff] %v783
        %1383 = vst [vmem:[%s245 + $0x548] sm:$0xff] %v785
        %1384 = vst [vmem:[%s245 + $0x550] sm:$0xff] %v1176
        %1385 = vst [vmem:[%s245 + $0x558] sm:$0xff] %v789
        %1386 = vst [vmem:[%s245 + $0x560] sm:$0xff] %v791
        %1387 = vst [vmem:[%s245 + $0x568] sm:$0xff] %v1181
        %1388 = vst [vmem:[%s245 + $0x570] sm:$0xff] %v795
        %1389 = vst [vmem:[%s245 + $0x578] sm:$0xff] %v797
        %1390 = vst [vmem:[%s245 + $0x580] sm:$0xff] %v1186
        %1391 = vst [vmem:[%s245 + $0x588] sm:$0xff] %v801
        %1392 = vst [vmem:[%s245 + $0x590] sm:$0xff] %v803
        %1393 = vst [vmem:[%s245 + $0x598] sm:$0xff] %v1191
        %1394 = vst [vmem:[%s245 + $0x5a0] sm:$0xff] %v807
        %1395 = vst [vmem:[%s245 + $0x5a8] sm:$0xff] %v809
        %1396 = vst [vmem:[%s245 + $0x5b0] sm:$0xff] %v1196
        %1397 = vst [vmem:[%s245 + $0x5b8] sm:$0xff] %v813
        %1398 = vst [vmem:[%s245 + $0x5c0] sm:$0xff] %v815
        %1399 = vst [vmem:[%s245 + $0x5c8] sm:$0xff] %v1201
        %1400 = vst [vmem:[%s245 + $0x5d0] sm:$0xff] %v819
        %1401 = vst [vmem:[%s245 + $0x5d8] sm:$0xff] %v821
        %1402 = vst [vmem:[%s245 + $0x5e0] sm:$0xff] %v1206
        %1403 = vst [vmem:[%s245 + $0x5e8] sm:$0xff] %v825
        %1404 = vst [vmem:[%s245 + $0x5f0] sm:$0xff] %v827
        %1405 = vst [vmem:[%s245 + $0x5f8] sm:$0xff] %v1211
        %s1406 = sand.u32 %s121, 1
        %s1407 = scalar_lea.sflag [#allocation4], %s1406
        %s1408 = sand.u32 %s121, 1
        %s1409 = smul.addr %s1408, 1536
        %s1410 = scalar_lea.vmem [#allocation8], %s1409
        // Predicated region
        $region45: #{tpu_custom_call.1} parent=31 // pred_check
          %p1411 = pneg %p131
        $region46: #{tpu_custom_call.1} parent=31 // pred_check_branch
          %1413 = sbr.rel (%p1411) target = $region48
        $region47: #{tpu_custom_call.1} parent=31 // pred_region
          %s1414 = smul.u32 64, %s25
          %s1415 = smul.u32 3, %s26
          %s1417 = ssub.s32 24576, 24576
          %1418 = vsyncadd %s1407, %s1417
          %s1419 = smul.addr %s1414, 3
          %s1420 = sadd.s32 %s1415, %s1419
          %s1421 = smul.addr %s1420, 128
          %s1422 = scalar_lea.hbm %s3, %s1421
          %s1423 = sshll.u32 %s1410, 4
          %s1424 = int_to_ptr.vmem [resolvable:$true] %s1423
          %1429 = dma.vmem_to_hbm [thread:$0]  %s1424, 24576, %s1422, %s1407, 384, 384, 24
        $region48: #{tpu_custom_call.1} parent=31 // pred_fallthru
          _
      $region32: #{tpu_custom_call.1} parent=5 // pred_fallthru
        _
      %p1430 = scmp.le.s32.totalorder 2, %s16
      // Predicated region
      $region49: #{tpu_custom_call.1} parent=5 // pred_check
        %p1431 = pneg %p1430
      $region50: #{tpu_custom_call.1} parent=5 // pred_check_branch
        %1433 = sbr.rel (%p1431) target = $region52
      $region51: #{tpu_custom_call.1} parent=5 // pred_region
        %s1434 = ssub.s32 %s16, 2
        // Predicated region
        $region53: #{tpu_custom_call.1} parent=51 // pred_check
          %p1435 = pneg %p137
        $region54: #{tpu_custom_call.1} parent=51 // pred_check_branch
          %1437 = sbr.rel (%p1435) target = $region56
        $region55: #{tpu_custom_call.1} parent=51 // pred_region
          %s1438 = sand.u32 %s122, 1
          %s1439 = scalar_lea.sflag [#allocation4], %s1438
          %s1440 = sand.u32 %s122, 1
          %s1441 = smul.addr %s1440, 1536
          %s1442 = scalar_lea.vmem [#allocation8], %s1441
          %1443 = dma.done %s1439, 24576
        $region56: #{tpu_custom_call.1} parent=51 // pred_fallthru
          _
      $region52: #{tpu_custom_call.1} parent=5 // pred_fallthru
        _
    $region6: #{tpu_custom_call.1} parent=1 // loop_footer
      %s20 = sadd.s32 1, %s16
    $region7: #{tpu_custom_call.1} parent=1 // loop_footer_branch
      %15 = sbr.rel target = $region3
    $region8: #{tpu_custom_call.1} parent=1 // loop_exit
      _
    %1444 = vsyncpa [#allocation3], 1
    %s1445 = scalar_lea.sflag [#allocation3], 1
    %1446 = vsyncpa %s1445, 1
    %1447 = vsyncpa [#allocation6], 1
    %1448 = vsyncpa [#allocation4], 1
    %s1449 = scalar_lea.sflag [#allocation4], 1
    %1450 = vsyncpa %s1449, 1

</llo_original>
